<compile_context>
chip_gen: v7x
topology: tpu7x:2x2x1
jax: 0.10.0
libtpu: 0.0.40
codegen_flags: <defaults>
</compile_context>

<pallas_src>
import functools

import jax
import jax.numpy as jnp
import numpy as np
from jax.experimental import pallas as pl
from jax.experimental.pallas import tpu as pltpu


# ---------------------------------------------------------------------------
# helpers (usable both inside the kernel and in the pure-JAX reference)
# ---------------------------------------------------------------------------
def _sigmoid(x):
    return 1.0 / (1.0 + jnp.exp(-x))


def _log_sigmoid(x):
    # numerically stable log(sigmoid(x))
    return jnp.minimum(x, 0.0) - jnp.log(1.0 + jnp.exp(-jnp.abs(x)))


# ---------------------------------------------------------------------------
# Pallas kernel
# ---------------------------------------------------------------------------
def decoder_attention_kernel(
    # activations (per batch tile)
    xh_ref,        # (bt, E+H)  f32   [x | h_prev]
    c0_ref,        # (bt, H)    f32
    enc_ref,       # (bt, M, H) bf16  (for context matmul)
    encp_ref,      # (bt, M, H) f32   Wm(enc) + wm_b + wh_b  (hoisted projection)
    maskadd_ref,   # (bt, M)    f32   additive mask (+ v_b folded in)
    hp_ref,        # (bt, H)    f32
    # fused params
    w_lstm_ref,    # (E+H, 4H)  bf16
    b_lstm_ref,    # (1, 4H)    f32
    wh_w_ref,      # (H, H)     bf16
    v_w_ref,       # (1, H)     f32
    w_head_ref,    # (3H, VT2+1) bf16  [wg | switcher-column]
    b_head_ref,    # (1, VT2+1)  f32
    # outputs
    wt_out_ref, attn_out_ref, h_out_ref, c_out_ref,
):
    H = c0_ref.shape[-1]
    VT2 = wt_out_ref.shape[-1]
    mm_dtype = w_lstm_ref.dtype

    xh = xh_ref[...]
    c0 = c0_ref[...]

    # ---- fused single-step LSTM cell (one MXU pass, gate order i,f,g,o) ----
    gates = (
        jnp.dot(xh.astype(mm_dtype), w_lstm_ref[...],
                preferred_element_type=jnp.float32)
        + b_lstm_ref[...]
    )  # (bt, 4H)  f32
    # NOTE: with realistic H (multiple of 128) these slices are lane-aligned.
    i_g = _sigmoid(gates[:, 0 * H:1 * H])
    f_g = _sigmoid(gates[:, 1 * H:2 * H])
    g_g = jnp.tanh(gates[:, 2 * H:3 * H])
    o_g = _sigmoid(gates[:, 3 * H:4 * H])
    c_new = f_g * c0 + i_g * g_g
    h_new = o_g * jnp.tanh(c_new)              # == lstm "out" and h[-1]
    h_out_ref[...] = h_new
    c_out_ref[...] = c_new

    # ---- additive attention (memory projection precomputed in wrapper) ----
    sq = jnp.dot(h_new.astype(mm_dtype), wh_w_ref[...],
                 preferred_element_type=jnp.float32)            # (bt, H)
    sc = jnp.tanh(sq[:, None, :] + encp_ref[...])               # (bt, M, H) f32 elementwise
    v_row = v_w_ref[...].reshape(1, 1, H)
    s = jnp.sum(sc * v_row, axis=2) + maskadd_ref[...]          # (bt, M) masked scores

    # softmax / log-softmax over the memory axis
    s_max = jnp.max(s, axis=1, keepdims=True)
    e = jnp.exp(s - s_max)
    denom = jnp.sum(e, axis=1, keepdims=True)
    attn = e * pl.reciprocal(denom, approx=True)                # softmax weights
    attn_log = (s - s_max) - jnp.log(denom)                     # log_softmax(scores)

    # context = attn @ enc_out : MXU-routed batched matmul (no (B,M,H) VPU temp)
    ctx = jnp.einsum(
        "bqm,bmh->bqh",
        attn[:, None, :].astype(enc_ref.dtype),
        enc_ref[...],
        preferred_element_type=jnp.float32,
    )[:, 0, :]                                                  # (bt, H)

    # ---- fused pointer output head + switcher (single K=3H matmul) ----
    feats = jnp.concatenate([ctx, h_new, hp_ref[...]], axis=1).astype(w_head_ref.dtype)
    logits = (
        jnp.dot(feats, w_head_ref[...], preferred_element_type=jnp.float32)
        + b_head_ref[...]
    )                                                           # (bt, VT2+1)
    wt = logits[:, :VT2]
    ws = logits[:, VT2:VT2 + 1]                                 # switcher column

    wt_max = jnp.max(wt, axis=1, keepdims=True)
    wt_log = (wt - wt_max) - jnp.log(
        jnp.sum(jnp.exp(wt - wt_max), axis=1, keepdims=True))

    wt_out_ref[...] = _log_sigmoid(ws) + wt_log
    attn_out_ref[...] = _log_sigmoid(-ws) + attn_log


# ---------------------------------------------------------------------------
# wrapper
# ---------------------------------------------------------------------------
def _pad_batch(a, target_b):
    pad = target_b - a.shape[0]
    if pad == 0:
        return a
    return jnp.pad(a, [(0, pad)] + [(0, 0)] * (a.ndim - 1))


@functools.partial(jax.jit, static_argnames=("block_b",))
def decoder_attention_forward(n_idx, t_idx, h0, c0, enc_out, mask, h_parent, kp,
                              *, block_b=8):
    """Mirrors DecoderAttention.forward (dropout=0, num_layers=1, pointer=True)."""
    embN, embT = kp["embN"], kp["embT"]
    vocabN = embN.shape[0]
    vocabT_rows = embT.shape[0]

    # words[words >= weight.size(0)] = padding_idx
    n_idx = jnp.where(n_idx >= vocabN, kp["padN"], n_idx)
    t_idx = jnp.where(t_idx >= vocabT_rows, kp["padT"], t_idx)
    x = jnp.concatenate([embN[n_idx], embT[t_idx]], axis=1).astype(jnp.float32)  # (B, E)

    B, M, H = enc_out.shape
    VT2 = kp["b_head"].shape[-1] - 1
    h0_l = h0[0].astype(jnp.float32)     # num_layers = 1
    c0_l = c0[0].astype(jnp.float32)

    # fused LSTM input [x | h_prev]
    xh = jnp.concatenate([x, h0_l], axis=1)                                      # (B, E+H)
    EH = xh.shape[1]

    # Hoisted memory projection (constant across decode steps); wh_b folded in so the
    # kernel's query projection is bias-free.
    enc_proj = (enc_out @ kp["wm_w"] + kp["wm_b"] + kp["wh_b"]).astype(jnp.float32)
    # Additive mask with the scalar score bias v_b folded in (kernel just adds it).
    mask_add = (jnp.where(mask, -1e20, 0.0) + kp["v_b"]).astype(jnp.float32)
    enc_mm = enc_out.astype(kp["w_head"].dtype)   # bf16 operand for context matmul

    bt = block_b
    Bp = ((B + bt - 1) // bt) * bt
    xh_p = _pad_batch(xh, Bp)
    c0_p = _pad_batch(c0_l, Bp)
    enc_p = _pad_batch(enc_mm, Bp)
    encp_p = _pad_batch(enc_proj, Bp)
    mask_p = _pad_batch(mask_add, Bp)
    hp_p = _pad_batch(h_parent.astype(jnp.float32), Bp)

    kernel_inputs = (
        xh_p, c0_p, enc_p, encp_p, mask_p, hp_p,
        kp["w_lstm"], kp["b_lstm"], kp["wh_w"], kp["v_w"],
        kp["w_head"], kp["b_head"],
    )

    # TODO(synk): for realistic vocab sizes the fused (3H, VT2+1) head should be
    # N-tiled over a second grid axis with a two-pass log-softmax and a streamed
    # (HBM-resident) head weight; toy VT2=16 fits in VMEM so it is kept resident.
    wt_part, attn_part, h_new, c_new = pl.pallas_call(
        decoder_attention_kernel,
        out_shape=(
            jax.ShapeDtypeStruct((Bp, VT2), jnp.float32),
            jax.ShapeDtypeStruct((Bp, M), jnp.float32),
            jax.ShapeDtypeStruct((Bp, H), jnp.float32),
            jax.ShapeDtypeStruct((Bp, H), jnp.float32),
        ),
        grid=(Bp // bt,),
        in_specs=[
            pl.BlockSpec((bt, EH), lambda b: (b, 0)),
            pl.BlockSpec((bt, H), lambda b: (b, 0)),
            pl.BlockSpec((bt, M, H), lambda b: (b, 0, 0)),
            pl.BlockSpec((bt, M, H), lambda b: (b, 0, 0)),
            pl.BlockSpec((bt, M), lambda b: (b, 0)),
            pl.BlockSpec((bt, H), lambda b: (b, 0)),
            pl.BlockSpec((EH, 4 * H), lambda b: (0, 0)),
            pl.BlockSpec((1, 4 * H), lambda b: (0, 0)),
            pl.BlockSpec((H, H), lambda b: (0, 0)),
            pl.BlockSpec((1, H), lambda b: (0, 0)),
            pl.BlockSpec((3 * H, VT2 + 1), lambda b: (0, 0)),
            pl.BlockSpec((1, VT2 + 1), lambda b: (0, 0)),
        ],
        out_specs=(
            pl.BlockSpec((bt, VT2), lambda b: (b, 0)),
            pl.BlockSpec((bt, M), lambda b: (b, 0)),
            pl.BlockSpec((bt, H), lambda b: (b, 0)),
            pl.BlockSpec((bt, H), lambda b: (b, 0)),
        ),
        # recycle the cell-state buffer in a decode loop (input 1 = c0, output 3 = c_new)
        input_output_aliases={1: 3},
        compiler_params=pltpu.CompilerParams(
            dimension_semantics=("parallel",),      # batch tiles across megacore / v7x TCs
            vmem_limit_bytes=48 * 1024 * 1024,      # explicit budget; fits v7x's 64 MiB VMEM
        ),
    )(*kernel_inputs)

    out = jnp.concatenate([wt_part[:B], attn_part[:B]], axis=1)  # (B, VT2 + M)
    return out, (h_new[:B][None], c_new[:B][None])


# ---------------------------------------------------------------------------
# parameter construction
# ---------------------------------------------------------------------------
def init_params(key, *, hidden, vocabN, vocabT, embN_dim, embT_dim, attn_size):
    keys = jax.random.split(key, 20)
    E = embN_dim + embT_dim
    VT2 = vocabT + 2

    def w(k, shape, scale=0.1):
        return (scale * jax.random.normal(k, shape)).astype(jnp.float32)

    embN = w(keys[0], (vocabN, embN_dim))
    embN = embN.at[vocabN - 1].set(0.0)                   # nn.Embedding padding row
    embT = w(keys[1], (vocabT + attn_size + 2, embT_dim))
    embT = embT.at[vocabT - 1].set(0.0)

    return dict(
        embN=embN, embT=embT, padN=vocabN - 1, padT=vocabT - 1,
        # LSTM (single layer), gate order i,f,g,o; bias = b_ih + b_hh folded
        w_ih=w(keys[2], (E, 4 * hidden)),
        w_hh=w(keys[3], (hidden, 4 * hidden)),
        b_lstm=w(keys[4], (1, 4 * hidden), 0.05),
        # attention
        wh_w=w(keys[5], (hidden, hidden)), wh_b=w(keys[6], (1, hidden), 0.05),
        wm_w=w(keys[7], (hidden, hidden)), wm_b=w(keys[8], (1, hidden), 0.05),
        v_w=w(keys[9], (1, hidden)), v_b=w(keys[10], (1, 1), 0.05),
        # w_global, split by input slab [context | out | h_parent]
        wg_wc=w(keys[11], (hidden, VT2)),
        wg_wo=w(keys[12], (hidden, VT2)),
        wg_wp=w(keys[13], (hidden, VT2)),
        wg_b=w(keys[14], (1, VT2), 0.05),
        # w_switcher, split by [context | out]
        ws_wc=w(keys[15], (1, hidden)),
        ws_wo=w(keys[16], (1, hidden)),
        ws_b=w(keys[17], (1, 1), 0.05),
    )


def fuse_params(p, matmul_dtype=jnp.bfloat16):
    """Build the kernel-ready parameter set: fused weights, bf16 MXU operands,
    scalar biases folded (done once; reused every decode step)."""
    H = p["wh_w"].shape[0]
    # fused LSTM weight: [w_ih ; w_hh] -> (E+H, 4H)
    w_lstm = jnp.concatenate([p["w_ih"], p["w_hh"]], axis=0)
    # fused head: (3H, VT2) for w_global + one extra column for the switcher
    w_head_main = jnp.concatenate([p["wg_wc"], p["wg_wo"], p["wg_wp"]], axis=0)
    w_head_sw = jnp.concatenate(
        [p["ws_wc"].T, p["ws_wo"].T, jnp.zeros((H, 1), jnp.float32)], axis=0)
    w_head = jnp.concatenate([w_head_main, w_head_sw], axis=1)        # (3H, VT2+1)
    b_head = jnp.concatenate([p["wg_b"], p["ws_b"]], axis=1)          # (1, VT2+1)
    return dict(
        embN=p["embN"], embT=p["embT"], padN=p["padN"], padT=p["padT"],
        w_lstm=w_lstm.astype(matmul_dtype),
        b_lstm=p["b_lstm"],
        wh_w=p["wh_w"].astype(matmul_dtype),
        wm_w=p["wm_w"], wm_b=p["wm_b"], wh_b=p["wh_b"],
        v_w=p["v_w"], v_b=p["v_b"],
        w_head=w_head.astype(matmul_dtype),
        b_head=b_head,
    )


# ---------------------------------------------------------------------------
# pure-JAX reference (same math, f32, no Pallas) used only for a sanity check
# ---------------------------------------------------------------------------
def reference_forward(n_idx, t_idx, h0, c0, enc_out, mask, h_parent, params):
    embN, embT = params["embN"], params["embT"]
    n_idx = jnp.where(n_idx >= embN.shape[0], params["padN"], n_idx)
    t_idx = jnp.where(t_idx >= embT.shape[0], params["padT"], t_idx)
    x = jnp.concatenate([embN[n_idx], embT[t_idx]], axis=1).astype(jnp.float32)

    h0_l, c0_l = h0[0], c0[0]
    H = h0_l.shape[-1]
    gates = x @ params["w_ih"] + h0_l @ params["w_hh"] + params["b_lstm"]
    i_g = _sigmoid(gates[:, 0 * H:1 * H])
    f_g = _sigmoid(gates[:, 1 * H:2 * H])
    g_g = jnp.tanh(gates[:, 2 * H:3 * H])
    o_g = _sigmoid(gates[:, 3 * H:4 * H])
    c_new = f_g * c0_l + i_g * g_g
    h_new = o_g * jnp.tanh(c_new)

    sq = h_new @ params["wh_w"] + params["wh_b"]
    sm = enc_out @ params["wm_w"] + params["wm_b"]
    sc = jnp.tanh(sq[:, None, :] + sm)
    s = jnp.sum(sc * params["v_w"].reshape(1, 1, H), axis=2) + params["v_b"]
    s = jnp.where(mask, -1e20, s)
    s_max = jnp.max(s, axis=1, keepdims=True)
    e = jnp.exp(s - s_max)
    denom = jnp.sum(e, axis=1, keepdims=True)
    attn = e / denom
    attn_log = (s - s_max) - jnp.log(denom)
    context = jnp.sum(attn[:, :, None] * enc_out, axis=1)

    wt = (context @ params["wg_wc"] + h_new @ params["wg_wo"]
          + h_parent @ params["wg_wp"] + params["wg_b"])
    wt_max = jnp.max(wt, axis=1, keepdims=True)
    wt_log = (wt - wt_max) - jnp.log(jnp.sum(jnp.exp(wt - wt_max), axis=1, keepdims=True))
    ws = (jnp.sum(context * params["ws_wc"], axis=1, keepdims=True)
          + jnp.sum(h_new * params["ws_wo"], axis=1, keepdims=True) + params["ws_b"])
    out = jnp.concatenate([_log_sigmoid(ws) + wt_log, _log_sigmoid(-ws) + attn_log], axis=1)
    return out, (h_new[None], c_new[None])


# ---------------------------------------------------------------------------
if __name__ == "__main__":
    # small config consistent with the module
    B = 16
    hidden = 32
    vocab_sizeN = 12
    vocab_sizeT = 14
    embedding_sizeN = 16
    embedding_sizeT = 16
    attn_size = 8
    M = 8                      # enc_out length
    num_layers = 1             # state shape (1, B, hidden)
    block_b = 8                # batch tile (sublane-aligned), grid = (2,)
    # dropout = 0.0            # embedded_dropout degenerates to plain lookup
    # TODO(synk): embedded_dropout's Bernoulli row-mask (train-time only) is not
    # reproduced; the dropout=0 path is implemented.

    key = jax.random.PRNGKey(0)
    k_par, k_n, k_t, k_h, k_c, k_enc, k_hp, k_len = jax.random.split(key, 8)

    params = init_params(
        k_par, hidden=hidden, vocabN=vocab_sizeN, vocabT=vocab_sizeT,
        embN_dim=embedding_sizeN, embT_dim=embedding_sizeT, attn_size=attn_size,
    )
    kparams = fuse_params(params)   # fused / bf16 kernel-ready params (built once)

    n_input = jax.random.randint(k_n, (B,), 0, vocab_sizeN)
    t_input = jax.random.randint(k_t, (B,), 0, vocab_sizeT + attn_size + 2)
    h0 = (0.1 * jax.random.normal(k_h, (num_layers, B, hidden))).astype(jnp.float32)
    c0 = (0.1 * jax.random.normal(k_c, (num_layers, B, hidden))).astype(jnp.float32)
    enc_out = (0.1 * jax.random.normal(k_enc, (B, M, hidden))).astype(jnp.float32)
    h_parent = (0.1 * jax.random.normal(k_hp, (B, hidden))).astype(jnp.float32)
    lengths = jax.random.randint(k_len, (B,), 1, M + 1)
    mask = jnp.arange(M)[None, :] >= lengths[:, None]        # True == masked

    out, (h_new, c_new) = decoder_attention_forward(
        n_input, t_input, h0, c0, enc_out, mask, h_parent, kparams, block_b=block_b
    )
    jax.block_until_ready((out, h_new, c_new))

    ref_out, (ref_h, ref_c) = reference_forward(
        n_input, t_input, h0, c0, enc_out, mask, h_parent, params
    )
    # bf16 MXU operands with f32 accumulation -> slightly looser tolerance than pure f32
    np.testing.assert_allclose(np.asarray(out), np.asarray(ref_out), rtol=2e-2, atol=2e-2)
    np.testing.assert_allclose(np.asarray(h_new), np.asarray(ref_h), rtol=2e-2, atol=2e-2)
    np.testing.assert_allclose(np.asarray(c_new), np.asarray(ref_c), rtol=2e-2, atol=2e-2)

    assert out.shape == (B, vocab_sizeT + 2 + M)
    print("KERNEL_OK")
</pallas_src>

<mosaic_0001>
module attributes {stable_mosaic.version = 11 : i64} {
  func.func @decoder_attention_kernel(%arg0: i32, %arg1: memref<8x64xf32, #tpu.memory_space<vmem>>, %arg2: memref<8x32xf32, #tpu.memory_space<vmem>>, %arg3: memref<8x8x32xbf16, #tpu.memory_space<vmem>>, %arg4: memref<8x8x32xf32, #tpu.memory_space<vmem>>, %arg5: memref<8x8xf32, #tpu.memory_space<vmem>>, %arg6: memref<8x32xf32, #tpu.memory_space<vmem>>, %arg7: memref<64x128xbf16, #tpu.memory_space<vmem>>, %arg8: memref<1x128xf32, #tpu.memory_space<vmem>>, %arg9: memref<32x32xbf16, #tpu.memory_space<vmem>>, %arg10: memref<1x32xf32, #tpu.memory_space<vmem>>, %arg11: memref<96x17xbf16, #tpu.memory_space<vmem>>, %arg12: memref<1x17xf32, #tpu.memory_space<vmem>>, %arg13: memref<8x16xf32, #tpu.memory_space<vmem>>, %arg14: memref<8x8xf32, #tpu.memory_space<vmem>>, %arg15: memref<8x32xf32, #tpu.memory_space<vmem>>, %arg16: memref<8x32xf32, #tpu.memory_space<vmem>>) attributes {dimension_semantics = [#tpu.dimension_semantics<parallel>], iteration_bounds = array<i64: 2>, scalar_prefetch = 0 : i64, scratch_operands = 0 : i64, tpu.core_type = #tpu.core_type<tc>, window_params = [{transform_indices = @transform_0, window_bounds = array<i64: 8, 64>}, {transform_indices = @transform_1, window_bounds = array<i64: 8, 32>}, {transform_indices = @transform_2, window_bounds = array<i64: 8, 8, 32>}, {transform_indices = @transform_3, window_bounds = array<i64: 8, 8, 32>}, {transform_indices = @transform_4, window_bounds = array<i64: 8, 8>}, {transform_indices = @transform_5, window_bounds = array<i64: 8, 32>}, {pipeline_mode = #tpu.pipeline_mode<synchronous>, transform_indices = @transform_6, window_bounds = array<i64: 64, 128>}, {pipeline_mode = #tpu.pipeline_mode<synchronous>, transform_indices = @transform_7, window_bounds = array<i64: 1, 128>}, {pipeline_mode = #tpu.pipeline_mode<synchronous>, transform_indices = @transform_8, window_bounds = array<i64: 32, 32>}, {pipeline_mode = #tpu.pipeline_mode<synchronous>, transform_indices = @transform_9, window_bounds = array<i64: 1, 32>}, {pipeline_mode = #tpu.pipeline_mode<synchronous>, transform_indices = @transform_10, window_bounds = array<i64: 96, 17>}, {pipeline_mode = #tpu.pipeline_mode<synchronous>, transform_indices = @transform_11, window_bounds = array<i64: 1, 17>}, {transform_indices = @transform_12, window_bounds = array<i64: 8, 16>}, {transform_indices = @transform_13, window_bounds = array<i64: 8, 8>}, {transform_indices = @transform_14, window_bounds = array<i64: 8, 32>}, {transform_indices = @transform_15, window_bounds = array<i64: 8, 32>}]} {
    %c0 = arith.constant 0 : index
    %c0_0 = arith.constant 0 : index
    %0 = vector.load %arg1[%c0, %c0_0] : memref<8x64xf32, #tpu.memory_space<vmem>>, vector<8x64xf32>
    %c0_1 = arith.constant 0 : index
    %c0_2 = arith.constant 0 : index
    %1 = vector.load %arg2[%c0_1, %c0_2] : memref<8x32xf32, #tpu.memory_space<vmem>>, vector<8x32xf32>
    %2 = arith.truncf %0 : vector<8x64xf32> to vector<8x64xbf16>
    %c0_3 = arith.constant 0 : index
    %c0_4 = arith.constant 0 : index
    %3 = vector.load %arg7[%c0_3, %c0_4] : memref<64x128xbf16, #tpu.memory_space<vmem>>, vector<64x128xbf16>
    %cst = arith.constant dense<0.000000e+00> : vector<8x128xf32>
    %4 = tpu.matmul %2, %3, %cst {dimension_numbers = #tpu.dot_dimension_numbers<[1], [0], [0], [1], [0, 0, 1, 1], [], []>} : vector<8x64xbf16>, vector<64x128xbf16>, vector<8x128xf32> -> vector<8x128xf32>
    %c0_5 = arith.constant 0 : index
    %c0_6 = arith.constant 0 : index
    %5 = vector.load %arg8[%c0_5, %c0_6] : memref<1x128xf32, #tpu.memory_space<vmem>>, vector<1x128xf32>
    %6 = vector.broadcast %5 : vector<1x128xf32> to vector<8x128xf32>
    %7 = arith.addf %4, %6 : vector<8x128xf32>
    %8 = vector.extract_strided_slice %7 {offsets = [0, 0], sizes = [8, 32], strides = [1, 1]} : vector<8x128xf32> to vector<8x32xf32>
    %cst_7 = arith.constant 0.000000e+00 : f32
    %9 = vector.broadcast %cst_7 : f32 to vector<8x32xf32>
    %10 = arith.subf %9, %8 : vector<8x32xf32>
    %11 = math.exp %10 : vector<8x32xf32>
    %cst_8 = arith.constant 1.000000e+00 : f32
    %12 = vector.broadcast %cst_8 : f32 to vector<8x32xf32>
    %13 = arith.addf %12, %11 : vector<8x32xf32>
    %cst_9 = arith.constant 1.000000e+00 : f32
    %14 = vector.broadcast %cst_9 : f32 to vector<8x32xf32>
    %15 = arith.divf %14, %13 : vector<8x32xf32>
    %16 = vector.extract_strided_slice %7 {offsets = [0, 32], sizes = [8, 32], strides = [1, 1]} : vector<8x128xf32> to vector<8x32xf32>
    %cst_10 = arith.constant 0.000000e+00 : f32
    %17 = vector.broadcast %cst_10 : f32 to vector<8x32xf32>
    %18 = arith.subf %17, %16 : vector<8x32xf32>
    %19 = math.exp %18 : vector<8x32xf32>
    %cst_11 = arith.constant 1.000000e+00 : f32
    %20 = vector.broadcast %cst_11 : f32 to vector<8x32xf32>
    %21 = arith.addf %20, %19 : vector<8x32xf32>
    %cst_12 = arith.constant 1.000000e+00 : f32
    %22 = vector.broadcast %cst_12 : f32 to vector<8x32xf32>
    %23 = arith.divf %22, %21 : vector<8x32xf32>
    %24 = vector.extract_strided_slice %7 {offsets = [0, 64], sizes = [8, 32], strides = [1, 1]} : vector<8x128xf32> to vector<8x32xf32>
    %25 = math.tanh %24 : vector<8x32xf32>
    %26 = vector.extract_strided_slice %7 {offsets = [0, 96], sizes = [8, 32], strides = [1, 1]} : vector<8x128xf32> to vector<8x32xf32>
    %cst_13 = arith.constant 0.000000e+00 : f32
    %27 = vector.broadcast %cst_13 : f32 to vector<8x32xf32>
    %28 = arith.subf %27, %26 : vector<8x32xf32>
    %29 = math.exp %28 : vector<8x32xf32>
    %cst_14 = arith.constant 1.000000e+00 : f32
    %30 = vector.broadcast %cst_14 : f32 to vector<8x32xf32>
    %31 = arith.addf %30, %29 : vector<8x32xf32>
    %cst_15 = arith.constant 1.000000e+00 : f32
    %32 = vector.broadcast %cst_15 : f32 to vector<8x32xf32>
    %33 = arith.divf %32, %31 : vector<8x32xf32>
    %34 = arith.mulf %23, %1 : vector<8x32xf32>
    %35 = arith.mulf %15, %25 : vector<8x32xf32>
    %36 = arith.addf %34, %35 : vector<8x32xf32>
    %37 = math.tanh %36 : vector<8x32xf32>
    %38 = arith.mulf %33, %37 : vector<8x32xf32>
    %c0_16 = arith.constant 0 : index
    %c0_17 = arith.constant 0 : index
    %39 = vector.load %arg15[%c0_16, %c0_17] : memref<8x32xf32, #tpu.memory_space<vmem>>, vector<8x32xf32>
    tpu.vector_store %arg15[%c0_16, %c0_17], %38 {strides = array<i32>} : memref<8x32xf32, #tpu.memory_space<vmem>>, vector<8x32xf32>,
    %c0_18 = arith.constant 0 : index
    %c0_19 = arith.constant 0 : index
    %40 = vector.load %arg16[%c0_18, %c0_19] : memref<8x32xf32, #tpu.memory_space<vmem>>, vector<8x32xf32>
    tpu.vector_store %arg16[%c0_18, %c0_19], %36 {strides = array<i32>} : memref<8x32xf32, #tpu.memory_space<vmem>>, vector<8x32xf32>,
    %41 = arith.truncf %38 : vector<8x32xf32> to vector<8x32xbf16>
    %c0_20 = arith.constant 0 : index
    %c0_21 = arith.constant 0 : index
    %42 = vector.load %arg9[%c0_20, %c0_21] : memref<32x32xbf16, #tpu.memory_space<vmem>>, vector<32x32xbf16>
    %cst_22 = arith.constant dense<0.000000e+00> : vector<8x32xf32>
    %43 = tpu.matmul %41, %42, %cst_22 {dimension_numbers = #tpu.dot_dimension_numbers<[1], [0], [0], [1], [0, 0, 1, 1], [], []>} : vector<8x32xbf16>, vector<32x32xbf16>, vector<8x32xf32> -> vector<8x32xf32>
    %44 = vector.shape_cast %43 : vector<8x32xf32> to vector<8x1x32xf32>
    %c0_23 = arith.constant 0 : index
    %c0_24 = arith.constant 0 : index
    %c0_25 = arith.constant 0 : index
    %45 = vector.load %arg4[%c0_23, %c0_24, %c0_25] : memref<8x8x32xf32, #tpu.memory_space<vmem>>, vector<8x8x32xf32>
    %46 = vector.broadcast %44 : vector<8x1x32xf32> to vector<8x8x32xf32>
    %47 = arith.addf %46, %45 : vector<8x8x32xf32>
    %48 = math.tanh %47 : vector<8x8x32xf32>
    %c0_26 = arith.constant 0 : index
    %c0_27 = arith.constant 0 : index
    %49 = vector.load %arg10[%c0_26, %c0_27] : memref<1x32xf32, #tpu.memory_space<vmem>>, vector<1x32xf32>
    %50 = vector.shape_cast %49 : vector<1x32xf32> to vector<1x1x32xf32>
    %51 = vector.broadcast %50 : vector<1x1x32xf32> to vector<8x8x32xf32>
    %52 = arith.mulf %48, %51 : vector<8x8x32xf32>
    %cst_28 = arith.constant dense<0.000000e+00> : vector<8x8xf32>
    %53 = vector.multi_reduction <add>, %52, %cst_28 [2] : vector<8x8x32xf32> to vector<8x8xf32>
    %c0_29 = arith.constant 0 : index
    %c0_30 = arith.constant 0 : index
    %54 = vector.load %arg5[%c0_29, %c0_30] : memref<8x8xf32, #tpu.memory_space<vmem>>, vector<8x8xf32>
    %55 = arith.addf %53, %54 : vector<8x8xf32>
    %cst_31 = arith.constant dense<0xFF800000> : vector<8xf32>
    %56 = vector.multi_reduction <maximumf>, %55, %cst_31 [1] : vector<8x8xf32> to vector<8xf32>
    %57 = vector.shape_cast %56 : vector<8xf32> to vector<8x1xf32>
    %58 = vector.broadcast %57 : vector<8x1xf32> to vector<8x8xf32>
    %59 = arith.subf %55, %58 : vector<8x8xf32>
    %60 = math.exp %59 : vector<8x8xf32>
    %cst_32 = arith.constant dense<0.000000e+00> : vector<8xf32>
    %61 = vector.multi_reduction <add>, %60, %cst_32 [1] : vector<8x8xf32> to vector<8xf32>
    %62 = vector.shape_cast %61 : vector<8xf32> to vector<8x1xf32>
    %63 = tpu.reciprocal %62 {approx = true} : vector<8x1xf32> -> vector<8x1xf32>
    %64 = vector.broadcast %63 : vector<8x1xf32> to vector<8x8xf32>
    %65 = arith.mulf %60, %64 : vector<8x8xf32>
    %66 = vector.broadcast %57 : vector<8x1xf32> to vector<8x8xf32>
    %67 = arith.subf %55, %66 : vector<8x8xf32>
    %68 = math.log %62 : vector<8x1xf32>
    %69 = vector.broadcast %68 : vector<8x1xf32> to vector<8x8xf32>
    %70 = arith.subf %67, %69 : vector<8x8xf32>
    %71 = vector.shape_cast %65 : vector<8x8xf32> to vector<8x1x8xf32>
    %72 = arith.truncf %71 : vector<8x1x8xf32> to vector<8x1x8xbf16>
    %c0_33 = arith.constant 0 : index
    %c0_34 = arith.constant 0 : index
    %c0_35 = arith.constant 0 : index
    %73 = vector.load %arg3[%c0_33, %c0_34, %c0_35] : memref<8x8x32xbf16, #tpu.memory_space<vmem>>, vector<8x8x32xbf16>
    "tpu.trace_start"() <{level = 10 : i32, message = "bqm,bmh->bqh"}> : () -> ()
    %cst_36 = arith.constant dense<0.000000e+00> : vector<8x1x32xf32>
    %74 = tpu.matmul %72, %73, %cst_36 {dimension_numbers = #tpu.dot_dimension_numbers<[2], [1], [1], [2], [0, 0, 0, 1, 1, 2], [0], [0]>} : vector<8x1x8xbf16>, vector<8x8x32xbf16>, vector<8x1x32xf32> -> vector<8x1x32xf32>
    "tpu.trace_stop"() : () -> ()
    %75 = vector.shape_cast %74 : vector<8x1x32xf32> to vector<8x32xf32>
    %c0_37 = arith.constant 0 : index
    %c0_38 = arith.constant 0 : index
    %76 = vector.load %arg6[%c0_37, %c0_38] : memref<8x32xf32, #tpu.memory_space<vmem>>, vector<8x32xf32>
    %77 = tpu.concatenate %75, %38, %76 in 1 : vector<8x32xf32>, vector<8x32xf32>, vector<8x32xf32> -> vector<8x96xf32>
    %78 = arith.truncf %77 : vector<8x96xf32> to vector<8x96xbf16>
    %c0_39 = arith.constant 0 : index
    %c0_40 = arith.constant 0 : index
    %79 = vector.load %arg11[%c0_39, %c0_40] : memref<96x17xbf16, #tpu.memory_space<vmem>>, vector<96x17xbf16>
    %cst_41 = arith.constant dense<0.000000e+00> : vector<8x17xf32>
    %80 = tpu.matmul %78, %79, %cst_41 {dimension_numbers = #tpu.dot_dimension_numbers<[1], [0], [0], [1], [0, 0, 1, 1], [], []>} : vector<8x96xbf16>, vector<96x17xbf16>, vector<8x17xf32> -> vector<8x17xf32>
    %c0_42 = arith.constant 0 : index
    %c0_43 = arith.constant 0 : index
    %81 = vector.load %arg12[%c0_42, %c0_43] : memref<1x17xf32, #tpu.memory_space<vmem>>, vector<1x17xf32>
    %82 = vector.broadcast %81 : vector<1x17xf32> to vector<8x17xf32>
    %83 = arith.addf %80, %82 : vector<8x17xf32>
    %84 = vector.extract_strided_slice %83 {offsets = [0, 0], sizes = [8, 16], strides = [1, 1]} : vector<8x17xf32> to vector<8x16xf32>
    %85 = vector.extract_strided_slice %83 {offsets = [0, 16], sizes = [8, 1], strides = [1, 1]} : vector<8x17xf32> to vector<8x1xf32>
    %cst_44 = arith.constant dense<0xFF800000> : vector<8xf32>
    %86 = vector.multi_reduction <maximumf>, %84, %cst_44 [1] : vector<8x16xf32> to vector<8xf32>
    %87 = vector.shape_cast %86 : vector<8xf32> to vector<8x1xf32>
    %88 = vector.broadcast %87 : vector<8x1xf32> to vector<8x16xf32>
    %89 = arith.subf %84, %88 : vector<8x16xf32>
    %90 = vector.broadcast %87 : vector<8x1xf32> to vector<8x16xf32>
    %91 = arith.subf %84, %90 : vector<8x16xf32>
    %92 = math.exp %91 : vector<8x16xf32>
    %cst_45 = arith.constant dense<0.000000e+00> : vector<8xf32>
    %93 = vector.multi_reduction <add>, %92, %cst_45 [1] : vector<8x16xf32> to vector<8xf32>
    %94 = vector.shape_cast %93 : vector<8xf32> to vector<8x1xf32>
    %95 = math.log %94 : vector<8x1xf32>
    %96 = vector.broadcast %95 : vector<8x1xf32> to vector<8x16xf32>
    %97 = arith.subf %89, %96 : vector<8x16xf32>
    %cst_46 = arith.constant 0.000000e+00 : f32
    %98 = vector.broadcast %cst_46 : f32 to vector<8x1xf32>
    %99 = arith.minimumf %85, %98 : vector<8x1xf32>
    %100 = math.absf %85 : vector<8x1xf32>
    %cst_47 = arith.constant 0.000000e+00 : f32
    %101 = vector.broadcast %cst_47 : f32 to vector<8x1xf32>
    %102 = arith.subf %101, %100 : vector<8x1xf32>
    %103 = math.exp %102 : vector<8x1xf32>
    %cst_48 = arith.constant 1.000000e+00 : f32
    %104 = vector.broadcast %cst_48 : f32 to vector<8x1xf32>
    %105 = arith.addf %104, %103 : vector<8x1xf32>
    %106 = math.log %105 : vector<8x1xf32>
    %107 = arith.subf %99, %106 : vector<8x1xf32>
    %108 = vector.broadcast %107 : vector<8x1xf32> to vector<8x16xf32>
    %109 = arith.addf %108, %97 : vector<8x16xf32>
    %c0_49 = arith.constant 0 : index
    %c0_50 = arith.constant 0 : index
    %110 = vector.load %arg13[%c0_49, %c0_50] : memref<8x16xf32, #tpu.memory_space<vmem>>, vector<8x16xf32>
    tpu.vector_store %arg13[%c0_49, %c0_50], %109 {strides = array<i32>} : memref<8x16xf32, #tpu.memory_space<vmem>>, vector<8x16xf32>,
    %cst_51 = arith.constant 0.000000e+00 : f32
    %111 = vector.broadcast %cst_51 : f32 to vector<8x1xf32>
    %112 = arith.subf %111, %85 : vector<8x1xf32>
    %cst_52 = arith.constant 0.000000e+00 : f32
    %113 = vector.broadcast %cst_52 : f32 to vector<8x1xf32>
    %114 = arith.minimumf %112, %113 : vector<8x1xf32>
    %115 = math.absf %112 : vector<8x1xf32>
    %cst_53 = arith.constant 0.000000e+00 : f32
    %116 = vector.broadcast %cst_53 : f32 to vector<8x1xf32>
    %117 = arith.subf %116, %115 : vector<8x1xf32>
    %118 = math.exp %117 : vector<8x1xf32>
    %cst_54 = arith.constant 1.000000e+00 : f32
    %119 = vector.broadcast %cst_54 : f32 to vector<8x1xf32>
    %120 = arith.addf %119, %118 : vector<8x1xf32>
    %121 = math.log %120 : vector<8x1xf32>
    %122 = arith.subf %114, %121 : vector<8x1xf32>
    %123 = vector.broadcast %122 : vector<8x1xf32> to vector<8x8xf32>
    %124 = arith.addf %123, %70 : vector<8x8xf32>
    %c0_55 = arith.constant 0 : index
    %c0_56 = arith.constant 0 : index
    %125 = vector.load %arg14[%c0_55, %c0_56] : memref<8x8xf32, #tpu.memory_space<vmem>>, vector<8x8xf32>
    tpu.vector_store %arg14[%c0_55, %c0_56], %124 {strides = array<i32>} : memref<8x8xf32, #tpu.memory_space<vmem>>, vector<8x8xf32>,
    return
  }
  func.func @transform_0(%arg0: i32) -> (i32, i32) {
    %c0_i32 = arith.constant 0 : i32
    %c0_i32_0 = arith.constant 0 : i32
    return %arg0, %c0_i32 : i32, i32
  }
  func.func @transform_1(%arg0: i32) -> (i32, i32) {
    %c0_i32 = arith.constant 0 : i32
    %c0_i32_0 = arith.constant 0 : i32
    return %arg0, %c0_i32 : i32, i32
  }
  func.func @transform_2(%arg0: i32) -> (i32, i32, i32) {
    %c0_i32 = arith.constant 0 : i32
    %c0_i32_0 = arith.constant 0 : i32
    %c0_i32_1 = arith.constant 0 : i32
    return %arg0, %c0_i32, %c0_i32_0 : i32, i32, i32
  }
  func.func @transform_3(%arg0: i32) -> (i32, i32, i32) {
    %c0_i32 = arith.constant 0 : i32
    %c0_i32_0 = arith.constant 0 : i32
    %c0_i32_1 = arith.constant 0 : i32
    return %arg0, %c0_i32, %c0_i32_0 : i32, i32, i32
  }
  func.func @transform_4(%arg0: i32) -> (i32, i32) {
    %c0_i32 = arith.constant 0 : i32
    %c0_i32_0 = arith.constant 0 : i32
    return %arg0, %c0_i32 : i32, i32
  }
  func.func @transform_5(%arg0: i32) -> (i32, i32) {
    %c0_i32 = arith.constant 0 : i32
    %c0_i32_0 = arith.constant 0 : i32
    return %arg0, %c0_i32 : i32, i32
  }
  func.func @transform_6(%arg0: i32) -> (i32, i32) {
    %c0_i32 = arith.constant 0 : i32
    %c0_i32_0 = arith.constant 0 : i32
    %c0_i32_1 = arith.constant 0 : i32
    return %c0_i32, %c0_i32_0 : i32, i32
  }
  func.func @transform_7(%arg0: i32) -> (i32, i32) {
    %c0_i32 = arith.constant 0 : i32
    %c0_i32_0 = arith.constant 0 : i32
    %c0_i32_1 = arith.constant 0 : i32
    return %c0_i32, %c0_i32_0 : i32, i32
  }
  func.func @transform_8(%arg0: i32) -> (i32, i32) {
    %c0_i32 = arith.constant 0 : i32
    %c0_i32_0 = arith.constant 0 : i32
    %c0_i32_1 = arith.constant 0 : i32
    return %c0_i32, %c0_i32_0 : i32, i32
  }
  func.func @transform_9(%arg0: i32) -> (i32, i32) {
    %c0_i32 = arith.constant 0 : i32
    %c0_i32_0 = arith.constant 0 : i32
    %c0_i32_1 = arith.constant 0 : i32
    return %c0_i32, %c0_i32_0 : i32, i32
  }
  func.func @transform_10(%arg0: i32) -> (i32, i32) {
    %c0_i32 = arith.constant 0 : i32
    %c0_i32_0 = arith.constant 0 : i32
    %c0_i32_1 = arith.constant 0 : i32
    return %c0_i32, %c0_i32_0 : i32, i32
  }
  func.func @transform_11(%arg0: i32) -> (i32, i32) {
    %c0_i32 = arith.constant 0 : i32
    %c0_i32_0 = arith.constant 0 : i32
    %c0_i32_1 = arith.constant 0 : i32
    return %c0_i32, %c0_i32_0 : i32, i32
  }
  func.func @transform_12(%arg0: i32) -> (i32, i32) {
    %c0_i32 = arith.constant 0 : i32
    %c0_i32_0 = arith.constant 0 : i32
    return %arg0, %c0_i32 : i32, i32
  }
  func.func @transform_13(%arg0: i32) -> (i32, i32) {
    %c0_i32 = arith.constant 0 : i32
    %c0_i32_0 = arith.constant 0 : i32
    return %arg0, %c0_i32 : i32, i32
  }
  func.func @transform_14(%arg0: i32) -> (i32, i32) {
    %c0_i32 = arith.constant 0 : i32
    %c0_i32_0 = arith.constant 0 : i32
    return %arg0, %c0_i32 : i32, i32
  }
  func.func @transform_15(%arg0: i32) -> (i32, i32) {
    %c0_i32 = arith.constant 0 : i32
    %c0_i32_0 = arith.constant 0 : i32
    return %arg0, %c0_i32 : i32, i32
  }
}

</mosaic_0001>

<llo_original>
// kernel: decoder_attention_forward.1
$region0: #{decoder_attention_forward.1}
  #allocation0 [shape = 'u32[]', space=smem, size = 0x4, offset = 0x4, fixed_abs, tag = 'smem constant byte address 0x4 - core index']
  #allocation1 [shape = 'u32[144,128]{1,0:T(1,128)}', space=vmem, size = 0x12000, scoped, tag = 'internal scratch']
  %s0 = inlined_call_operand.vmem [shape: f32[16,64], index: 0, kind: input, shape index: {}]
  %s1 = inlined_call_operand.vmem [shape: f32[16,32], index: 1, kind: input, shape index: {}, may-alias: {1,15}]
  %s2 = inlined_call_operand.vmem [shape: bf16[16,8,32], index: 2, kind: input, shape index: {}]
  %s3 = inlined_call_operand.vmem [shape: f32[16,8,32], index: 3, kind: input, shape index: {}]
  %s4 = inlined_call_operand.vmem [shape: f32[16,8], index: 4, kind: input, shape index: {}]
  %s5 = inlined_call_operand.vmem [shape: f32[16,32], index: 5, kind: input, shape index: {}]
  %s6 = inlined_call_operand.vmem [shape: bf16[64,128], index: 6, kind: input, shape index: {}]
  %s7 = inlined_call_operand.vmem [shape: f32[1,128], index: 7, kind: input, shape index: {}]
  %s8 = inlined_call_operand.vmem [shape: bf16[32,32], index: 8, kind: input, shape index: {}]
  %s9 = inlined_call_operand.vmem [shape: f32[1,32], index: 9, kind: input, shape index: {}]
  %s10 = inlined_call_operand.vmem [shape: bf16[96,17], index: 10, kind: input, shape index: {}]
  %s11 = inlined_call_operand.vmem [shape: f32[1,17], index: 11, kind: input, shape index: {}]
  %s12 = inlined_call_operand.vmem [shape: f32[16,16], index: 12, kind: output, shape index: {0}]
  %s13 = inlined_call_operand.vmem [shape: f32[16,8], index: 13, kind: output, shape index: {1}]
  %s14 = inlined_call_operand.hbm [shape: f32[16,32], index: 14, kind: output, shape index: {2}]
  %s15 = inlined_call_operand.vmem [shape: f32[16,32], index: 15, kind: output, shape index: {3}, may-alias: {1,15}]
  %16 = xla_tuple %s12, %s13, %s14, %s15
  %s17 = sld [smem:[#allocation0]]
  $region105: #{decoder_attention_forward.1} parent=0
    _
  %s19 = ssub.s32 1, %s17
  %s20 = scalar_select 0, %s19, %s17
  $region1: #{decoder_attention_forward.1} parent=0
    #allocation2 [shape = 'u8[8192]{0}', space=vmem, size = 0x2000, scoped, tag = 'output window, operand 2']
    #allocation3 [shape = 's32[2]{0}', space=sflag, size = 0x8, scoped, tag = 'scoped memory for decoder_attention_forward.1']
    %21 = vsyncpa [#allocation3], 0
    %s22 = scalar_lea.sflag [#allocation3], 1
    %23 = vsyncpa %s22, 0
    loop: start=0, step=1, limit=4
    $region2: #{decoder_attention_forward.1} parent=1 // loop_pre_header
      _
    $region3: #{decoder_attention_forward.1} parent=1 // loop_header
      %s25 = sphi 0, %s29
      %p26 = scmp.ge.s32.totalorder %s25, 4
      %s35 = sphi 0, %s37
      %s38 = sphi 0, %s35
      %s39 = sphi 0, %s38
      %s55 = sphi 0, %s39
      %s61 = sphi 0, %s63
      %s64 = sphi 0, %s61
      %s65 = sphi 0, %s64
      %s81 = sphi 0, %s65
      %s87 = sphi 0, %s89
      %s90 = sphi 0, %s87
      %s91 = sphi 0, %s90
      %s107 = sphi 0, %s91
      %s113 = sphi 0, %s115
      %s116 = sphi 0, %s113
      %s117 = sphi 0, %s116
      %s133 = sphi 0, %s117
      %s139 = sphi 0, %s141
      %s142 = sphi 0, %s139
      %s143 = sphi 0, %s142
      %s159 = sphi 0, %s143
      %s165 = sphi 0, %s167
      %s168 = sphi 0, %s165
      %s169 = sphi 0, %s168
      %s185 = sphi 0, %s169
      %s189 = sphi 0, %s189
      %s191 = sphi 0, %s189
      %s192 = sphi 0, %s191
      %s206 = sphi 0, %s192
      %s210 = sphi 0, %s210
      %s212 = sphi 0, %s210
      %s213 = sphi 0, %s212
      %s227 = sphi 0, %s213
      %s231 = sphi 0, %s231
      %s233 = sphi 0, %s231
      %s234 = sphi 0, %s233
      %s248 = sphi 0, %s234
      %s252 = sphi 0, %s252
      %s254 = sphi 0, %s252
      %s255 = sphi 0, %s254
      %s269 = sphi 0, %s255
      %s273 = sphi 0, %s273
      %s275 = sphi 0, %s273
      %s276 = sphi 0, %s275
      %s290 = sphi 0, %s276
      %s294 = sphi 0, %s294
      %s296 = sphi 0, %s294
      %s297 = sphi 0, %s296
      %s311 = sphi 0, %s297
      %s317 = sphi 0, %s319
      %s320 = sphi 0, %s317
      %s321 = sphi 0, %s320
      %s337 = sphi 0, %s321
      %s343 = sphi 0, %s345
      %s346 = sphi 0, %s343
      %s347 = sphi 0, %s346
      %s363 = sphi 0, %s347
      %s369 = sphi 0, %s371
      %s372 = sphi 0, %s369
      %s373 = sphi 0, %s372
      %s389 = sphi 0, %s373
      %s395 = sphi 0, %s397
      %s398 = sphi 0, %s395
      %s399 = sphi 0, %s398
      %s415 = sphi 0, %s399
    $region4: #{decoder_attention_forward.1} parent=1 // loop_header_branch
      %28 = sbr.rel (%p26) target = $region8
    $region5: #{decoder_attention_forward.1} parent=1 // loop_body
      %s30 = ssub.s32 %s25, 1
      %s31 = ssub.s32 %s25, 2
      %s32 = sadd.s32 %s25, 1
      %s33 = ssub.s32 %s25, %s32
      %p34 = scmp.eq.s32.totalorder %s33, 0
      %s36 = sadd.s32 %s35, 1
      %s37 = scalar_select %p34, %s35, %s36
      %p40 = pneg %p34
      %p41 = scmp.eq.s32.totalorder %s25, 1
      %p42 = por %p40, %p41
      %p43 = scmp.ne.s32.totalorder %s35, %s38
      %p44 = scmp.eq.s32.totalorder %s25, 0
      %p45 = por %p43, %p44
      %p46 = scmp.ne.s32.totalorder %s35, %s38
      %p47 = scmp.eq.s32.totalorder %s30, 1
      %p48 = por %p46, %p47
      %p49 = scmp.ne.s32.totalorder %s38, %s39
      %p50 = scmp.eq.s32.totalorder %s30, 0
      %p51 = por %p49, %p50
      %p52 = scmp.ne.s32.totalorder %s38, %s39
      %p53 = scmp.eq.s32.totalorder %s31, 1
      %p54 = por %p52, %p53
      %p56 = scmp.ne.s32.totalorder %s39, %s55
      %p57 = scmp.eq.s32.totalorder %s31, 0
      %p58 = por %p56, %p57
      %s59 = ssub.s32 %s25, %s32
      %p60 = scmp.eq.s32.totalorder %s59, 0
      %s62 = sadd.s32 %s61, 1
      %s63 = scalar_select %p60, %s61, %s62
      %p66 = pneg %p60
      %p67 = scmp.eq.s32.totalorder %s25, 1
      %p68 = por %p66, %p67
      %p69 = scmp.ne.s32.totalorder %s61, %s64
      %p70 = scmp.eq.s32.totalorder %s25, 0
      %p71 = por %p69, %p70
      %p72 = scmp.ne.s32.totalorder %s61, %s64
      %p73 = scmp.eq.s32.totalorder %s30, 1
      %p74 = por %p72, %p73
      %p75 = scmp.ne.s32.totalorder %s64, %s65
      %p76 = scmp.eq.s32.totalorder %s30, 0
      %p77 = por %p75, %p76
      %p78 = scmp.ne.s32.totalorder %s64, %s65
      %p79 = scmp.eq.s32.totalorder %s31, 1
      %p80 = por %p78, %p79
      %p82 = scmp.ne.s32.totalorder %s65, %s81
      %p83 = scmp.eq.s32.totalorder %s31, 0
      %p84 = por %p82, %p83
      %s85 = ssub.s32 %s25, %s32
      %p86 = scmp.eq.s32.totalorder %s85, 0
      %s88 = sadd.s32 %s87, 1
      %s89 = scalar_select %p86, %s87, %s88
      %p92 = pneg %p86
      %p93 = scmp.eq.s32.totalorder %s25, 1
      %p94 = por %p92, %p93
      %p95 = scmp.ne.s32.totalorder %s87, %s90
      %p96 = scmp.eq.s32.totalorder %s25, 0
      %p97 = por %p95, %p96
      %p98 = scmp.ne.s32.totalorder %s87, %s90
      %p99 = scmp.eq.s32.totalorder %s30, 1
      %p100 = por %p98, %p99
      %p101 = scmp.ne.s32.totalorder %s90, %s91
      %p102 = scmp.eq.s32.totalorder %s30, 0
      %p103 = por %p101, %p102
      %p104 = scmp.ne.s32.totalorder %s90, %s91
      %p105 = scmp.eq.s32.totalorder %s31, 1
      %p106 = por %p104, %p105
      %p108 = scmp.ne.s32.totalorder %s91, %s107
      %p109 = scmp.eq.s32.totalorder %s31, 0
      %p110 = por %p108, %p109
      %s111 = ssub.s32 %s25, %s32
      %p112 = scmp.eq.s32.totalorder %s111, 0
      %s114 = sadd.s32 %s113, 1
      %s115 = scalar_select %p112, %s113, %s114
      %p118 = pneg %p112
      %p119 = scmp.eq.s32.totalorder %s25, 1
      %p120 = por %p118, %p119
      %p121 = scmp.ne.s32.totalorder %s113, %s116
      %p122 = scmp.eq.s32.totalorder %s25, 0
      %p123 = por %p121, %p122
      %p124 = scmp.ne.s32.totalorder %s113, %s116
      %p125 = scmp.eq.s32.totalorder %s30, 1
      %p126 = por %p124, %p125
      %p127 = scmp.ne.s32.totalorder %s116, %s117
      %p128 = scmp.eq.s32.totalorder %s30, 0
      %p129 = por %p127, %p128
      %p130 = scmp.ne.s32.totalorder %s116, %s117
      %p131 = scmp.eq.s32.totalorder %s31, 1
      %p132 = por %p130, %p131
      %p134 = scmp.ne.s32.totalorder %s117, %s133
      %p135 = scmp.eq.s32.totalorder %s31, 0
      %p136 = por %p134, %p135
      %s137 = ssub.s32 %s25, %s32
      %p138 = scmp.eq.s32.totalorder %s137, 0
      %s140 = sadd.s32 %s139, 1
      %s141 = scalar_select %p138, %s139, %s140
      %p144 = pneg %p138
      %p145 = scmp.eq.s32.totalorder %s25, 1
      %p146 = por %p144, %p145
      %p147 = scmp.ne.s32.totalorder %s139, %s142
      %p148 = scmp.eq.s32.totalorder %s25, 0
      %p149 = por %p147, %p148
      %p150 = scmp.ne.s32.totalorder %s139, %s142
      %p151 = scmp.eq.s32.totalorder %s30, 1
      %p152 = por %p150, %p151
      %p153 = scmp.ne.s32.totalorder %s142, %s143
      %p154 = scmp.eq.s32.totalorder %s30, 0
      %p155 = por %p153, %p154
      %p156 = scmp.ne.s32.totalorder %s142, %s143
      %p157 = scmp.eq.s32.totalorder %s31, 1
      %p158 = por %p156, %p157
      %p160 = scmp.ne.s32.totalorder %s143, %s159
      %p161 = scmp.eq.s32.totalorder %s31, 0
      %p162 = por %p160, %p161
      %s163 = ssub.s32 %s25, %s32
      %p164 = scmp.eq.s32.totalorder %s163, 0
      %s166 = sadd.s32 %s165, 1
      %s167 = scalar_select %p164, %s165, %s166
      %p170 = pneg %p164
      %p171 = scmp.eq.s32.totalorder %s25, 1
      %p172 = por %p170, %p171
      %p173 = scmp.ne.s32.totalorder %s165, %s168
      %p174 = scmp.eq.s32.totalorder %s25, 0
      %p175 = por %p173, %p174
      %p176 = scmp.ne.s32.totalorder %s165, %s168
      %p177 = scmp.eq.s32.totalorder %s30, 1
      %p178 = por %p176, %p177
      %p179 = scmp.ne.s32.totalorder %s168, %s169
      %p180 = scmp.eq.s32.totalorder %s30, 0
      %p181 = por %p179, %p180
      %p182 = scmp.ne.s32.totalorder %s168, %s169
      %p183 = scmp.eq.s32.totalorder %s31, 1
      %p184 = por %p182, %p183
      %p186 = scmp.ne.s32.totalorder %s169, %s185
      %p187 = scmp.eq.s32.totalorder %s31, 0
      %p188 = por %p186, %p187
      %s190 = sadd.s32 %s189, 1
      %p193 = scmp.eq.s32.totalorder %s25, 1
      %p194 = scmp.ne.s32.totalorder %s189, %s191
      %p195 = scmp.eq.s32.totalorder %s25, 0
      %p196 = por %p194, %p195
      %p197 = scmp.ne.s32.totalorder %s189, %s191
      %p198 = scmp.eq.s32.totalorder %s30, 1
      %p199 = por %p197, %p198
      %p200 = scmp.ne.s32.totalorder %s191, %s192
      %p201 = scmp.eq.s32.totalorder %s30, 0
      %p202 = por %p200, %p201
      %p203 = scmp.ne.s32.totalorder %s191, %s192
      %p204 = scmp.eq.s32.totalorder %s31, 1
      %p205 = por %p203, %p204
      %p207 = scmp.ne.s32.totalorder %s192, %s206
      %p208 = scmp.eq.s32.totalorder %s31, 0
      %p209 = por %p207, %p208
      %s211 = sadd.s32 %s210, 1
      %p214 = scmp.eq.s32.totalorder %s25, 1
      %p215 = scmp.ne.s32.totalorder %s210, %s212
      %p216 = scmp.eq.s32.totalorder %s25, 0
      %p217 = por %p215, %p216
      %p218 = scmp.ne.s32.totalorder %s210, %s212
      %p219 = scmp.eq.s32.totalorder %s30, 1
      %p220 = por %p218, %p219
      %p221 = scmp.ne.s32.totalorder %s212, %s213
      %p222 = scmp.eq.s32.totalorder %s30, 0
      %p223 = por %p221, %p222
      %p224 = scmp.ne.s32.totalorder %s212, %s213
      %p225 = scmp.eq.s32.totalorder %s31, 1
      %p226 = por %p224, %p225
      %p228 = scmp.ne.s32.totalorder %s213, %s227
      %p229 = scmp.eq.s32.totalorder %s31, 0
      %p230 = por %p228, %p229
      %s232 = sadd.s32 %s231, 1
      %p235 = scmp.eq.s32.totalorder %s25, 1
      %p236 = scmp.ne.s32.totalorder %s231, %s233
      %p237 = scmp.eq.s32.totalorder %s25, 0
      %p238 = por %p236, %p237
      %p239 = scmp.ne.s32.totalorder %s231, %s233
      %p240 = scmp.eq.s32.totalorder %s30, 1
      %p241 = por %p239, %p240
      %p242 = scmp.ne.s32.totalorder %s233, %s234
      %p243 = scmp.eq.s32.totalorder %s30, 0
      %p244 = por %p242, %p243
      %p245 = scmp.ne.s32.totalorder %s233, %s234
      %p246 = scmp.eq.s32.totalorder %s31, 1
      %p247 = por %p245, %p246
      %p249 = scmp.ne.s32.totalorder %s234, %s248
      %p250 = scmp.eq.s32.totalorder %s31, 0
      %p251 = por %p249, %p250
      %s253 = sadd.s32 %s252, 1
      %p256 = scmp.eq.s32.totalorder %s25, 1
      %p257 = scmp.ne.s32.totalorder %s252, %s254
      %p258 = scmp.eq.s32.totalorder %s25, 0
      %p259 = por %p257, %p258
      %p260 = scmp.ne.s32.totalorder %s252, %s254
      %p261 = scmp.eq.s32.totalorder %s30, 1
      %p262 = por %p260, %p261
      %p263 = scmp.ne.s32.totalorder %s254, %s255
      %p264 = scmp.eq.s32.totalorder %s30, 0
      %p265 = por %p263, %p264
      %p266 = scmp.ne.s32.totalorder %s254, %s255
      %p267 = scmp.eq.s32.totalorder %s31, 1
      %p268 = por %p266, %p267
      %p270 = scmp.ne.s32.totalorder %s255, %s269
      %p271 = scmp.eq.s32.totalorder %s31, 0
      %p272 = por %p270, %p271
      %s274 = sadd.s32 %s273, 1
      %p277 = scmp.eq.s32.totalorder %s25, 1
      %p278 = scmp.ne.s32.totalorder %s273, %s275
      %p279 = scmp.eq.s32.totalorder %s25, 0
      %p280 = por %p278, %p279
      %p281 = scmp.ne.s32.totalorder %s273, %s275
      %p282 = scmp.eq.s32.totalorder %s30, 1
      %p283 = por %p281, %p282
      %p284 = scmp.ne.s32.totalorder %s275, %s276
      %p285 = scmp.eq.s32.totalorder %s30, 0
      %p286 = por %p284, %p285
      %p287 = scmp.ne.s32.totalorder %s275, %s276
      %p288 = scmp.eq.s32.totalorder %s31, 1
      %p289 = por %p287, %p288
      %p291 = scmp.ne.s32.totalorder %s276, %s290
      %p292 = scmp.eq.s32.totalorder %s31, 0
      %p293 = por %p291, %p292
      %s295 = sadd.s32 %s294, 1
      %p298 = scmp.eq.s32.totalorder %s25, 1
      %p299 = scmp.ne.s32.totalorder %s294, %s296
      %p300 = scmp.eq.s32.totalorder %s25, 0
      %p301 = por %p299, %p300
      %p302 = scmp.ne.s32.totalorder %s294, %s296
      %p303 = scmp.eq.s32.totalorder %s30, 1
      %p304 = por %p302, %p303
      %p305 = scmp.ne.s32.totalorder %s296, %s297
      %p306 = scmp.eq.s32.totalorder %s30, 0
      %p307 = por %p305, %p306
      %p308 = scmp.ne.s32.totalorder %s296, %s297
      %p309 = scmp.eq.s32.totalorder %s31, 1
      %p310 = por %p308, %p309
      %p312 = scmp.ne.s32.totalorder %s297, %s311
      %p313 = scmp.eq.s32.totalorder %s31, 0
      %p314 = por %p312, %p313
      %s315 = ssub.s32 %s25, %s32
      %p316 = scmp.eq.s32.totalorder %s315, 0
      %s318 = sadd.s32 %s317, 1
      %s319 = scalar_select %p316, %s317, %s318
      %p322 = pneg %p316
      %p323 = scmp.eq.s32.totalorder %s25, 1
      %p324 = por %p322, %p323
      %p325 = scmp.ne.s32.totalorder %s317, %s320
      %p326 = scmp.eq.s32.totalorder %s25, 0
      %p327 = por %p325, %p326
      %p328 = scmp.ne.s32.totalorder %s317, %s320
      %p329 = scmp.eq.s32.totalorder %s30, 1
      %p330 = por %p328, %p329
      %p331 = scmp.ne.s32.totalorder %s320, %s321
      %p332 = scmp.eq.s32.totalorder %s30, 0
      %p333 = por %p331, %p332
      %p334 = scmp.ne.s32.totalorder %s320, %s321
      %p335 = scmp.eq.s32.totalorder %s31, 1
      %p336 = por %p334, %p335
      %p338 = scmp.ne.s32.totalorder %s321, %s337
      %p339 = scmp.eq.s32.totalorder %s31, 0
      %p340 = por %p338, %p339
      %s341 = ssub.s32 %s25, %s32
      %p342 = scmp.eq.s32.totalorder %s341, 0
      %s344 = sadd.s32 %s343, 1
      %s345 = scalar_select %p342, %s343, %s344
      %p348 = pneg %p342
      %p349 = scmp.eq.s32.totalorder %s25, 1
      %p350 = por %p348, %p349
      %p351 = scmp.ne.s32.totalorder %s343, %s346
      %p352 = scmp.eq.s32.totalorder %s25, 0
      %p353 = por %p351, %p352
      %p354 = scmp.ne.s32.totalorder %s343, %s346
      %p355 = scmp.eq.s32.totalorder %s30, 1
      %p356 = por %p354, %p355
      %p357 = scmp.ne.s32.totalorder %s346, %s347
      %p358 = scmp.eq.s32.totalorder %s30, 0
      %p359 = por %p357, %p358
      %p360 = scmp.ne.s32.totalorder %s346, %s347
      %p361 = scmp.eq.s32.totalorder %s31, 1
      %p362 = por %p360, %p361
      %p364 = scmp.ne.s32.totalorder %s347, %s363
      %p365 = scmp.eq.s32.totalorder %s31, 0
      %p366 = por %p364, %p365
      %s367 = ssub.s32 %s25, %s32
      %p368 = scmp.eq.s32.totalorder %s367, 0
      %s370 = sadd.s32 %s369, 1
      %s371 = scalar_select %p368, %s369, %s370
      %p374 = pneg %p368
      %p375 = scmp.eq.s32.totalorder %s25, 1
      %p376 = por %p374, %p375
      %p377 = scmp.ne.s32.totalorder %s369, %s372
      %p378 = scmp.eq.s32.totalorder %s25, 0
      %p379 = por %p377, %p378
      %p380 = scmp.ne.s32.totalorder %s369, %s372
      %p381 = scmp.eq.s32.totalorder %s30, 1
      %p382 = por %p380, %p381
      %p383 = scmp.ne.s32.totalorder %s372, %s373
      %p384 = scmp.eq.s32.totalorder %s30, 0
      %p385 = por %p383, %p384
      %p386 = scmp.ne.s32.totalorder %s372, %s373
      %p387 = scmp.eq.s32.totalorder %s31, 1
      %p388 = por %p386, %p387
      %p390 = scmp.ne.s32.totalorder %s373, %s389
      %p391 = scmp.eq.s32.totalorder %s31, 0
      %p392 = por %p390, %p391
      %s393 = ssub.s32 %s25, %s32
      %p394 = scmp.eq.s32.totalorder %s393, 0
      %s396 = sadd.s32 %s395, 1
      %s397 = scalar_select %p394, %s395, %s396
      %p400 = pneg %p394
      %p401 = scmp.eq.s32.totalorder %s25, 1
      %p402 = por %p400, %p401
      %p403 = scmp.ne.s32.totalorder %s395, %s398
      %p404 = scmp.eq.s32.totalorder %s25, 0
      %p405 = por %p403, %p404
      %p406 = scmp.ne.s32.totalorder %s395, %s398
      %p407 = scmp.eq.s32.totalorder %s30, 1
      %p408 = por %p406, %p407
      %p409 = scmp.ne.s32.totalorder %s398, %s399
      %p410 = scmp.eq.s32.totalorder %s30, 0
      %p411 = por %p409, %p410
      %p412 = scmp.ne.s32.totalorder %s398, %s399
      %p413 = scmp.eq.s32.totalorder %s31, 1
      %p414 = por %p412, %p413
      %p416 = scmp.ne.s32.totalorder %s399, %s415
      %p417 = scmp.eq.s32.totalorder %s31, 0
      %p418 = por %p416, %p417
      %p419 = scmp.le.s32.totalorder 1, %s25
      %p420 = scmp.lt.s32.totalorder %s25, 3
      %p421 = pnand %p419, %p420
      %p422 = pneg %p421
      // Predicated region
      $region9: #{decoder_attention_forward.1} parent=5 // pred_check
        _
      $region10: #{decoder_attention_forward.1} parent=5 // pred_check_branch
        %424 = sbr.rel (%p421) target = $region12
      $region11: #{decoder_attention_forward.1} parent=5 // pred_region
        %s425 = ssub.s32 %s25, 1
        // Predicated region
        $region13: #{decoder_attention_forward.1} parent=11 // pred_check
          %p426 = pneg %p202
        $region14: #{decoder_attention_forward.1} parent=11 // pred_check_branch
          %428 = sbr.rel (%p426) target = $region16
        $region15: #{decoder_attention_forward.1} parent=11 // pred_region
          _
        $region16: #{decoder_attention_forward.1} parent=11 // pred_fallthru
          _
        // Predicated region
        $region17: #{decoder_attention_forward.1} parent=11 // pred_check
          %p429 = pneg %p223
        $region18: #{decoder_attention_forward.1} parent=11 // pred_check_branch
          %431 = sbr.rel (%p429) target = $region20
        $region19: #{decoder_attention_forward.1} parent=11 // pred_region
          _
        $region20: #{decoder_attention_forward.1} parent=11 // pred_fallthru
          _
        // Predicated region
        $region21: #{decoder_attention_forward.1} parent=11 // pred_check
          %p432 = pneg %p244
        $region22: #{decoder_attention_forward.1} parent=11 // pred_check_branch
          %434 = sbr.rel (%p432) target = $region24
        $region23: #{decoder_attention_forward.1} parent=11 // pred_region
          _
        $region24: #{decoder_attention_forward.1} parent=11 // pred_fallthru
          _
        // Predicated region
        $region25: #{decoder_attention_forward.1} parent=11 // pred_check
          %p435 = pneg %p265
        $region26: #{decoder_attention_forward.1} parent=11 // pred_check_branch
          %437 = sbr.rel (%p435) target = $region28
        $region27: #{decoder_attention_forward.1} parent=11 // pred_region
          _
        $region28: #{decoder_attention_forward.1} parent=11 // pred_fallthru
          _
        // Predicated region
        $region29: #{decoder_attention_forward.1} parent=11 // pred_check
          %p438 = pneg %p286
        $region30: #{decoder_attention_forward.1} parent=11 // pred_check_branch
          %440 = sbr.rel (%p438) target = $region32
        $region31: #{decoder_attention_forward.1} parent=11 // pred_region
          _
        $region32: #{decoder_attention_forward.1} parent=11 // pred_fallthru
          _
        // Predicated region
        $region33: #{decoder_attention_forward.1} parent=11 // pred_check
          %p441 = pneg %p307
        $region34: #{decoder_attention_forward.1} parent=11 // pred_check_branch
          %443 = sbr.rel (%p441) target = $region36
        $region35: #{decoder_attention_forward.1} parent=11 // pred_region
          _
        $region36: #{decoder_attention_forward.1} parent=11 // pred_fallthru
          _
      $region12: #{decoder_attention_forward.1} parent=5 // pred_fallthru
        _
      %p444 = scmp.lt.s32.totalorder %s25, 2
      // Predicated region
      $region37: #{decoder_attention_forward.1} parent=5 // pred_check
        %p445 = pneg %p444
      $region38: #{decoder_attention_forward.1} parent=5 // pred_check_branch
        %447 = sbr.rel (%p445) target = $region40
      $region39: #{decoder_attention_forward.1} parent=5 // pred_region
        // Predicated region
        $region41: #{decoder_attention_forward.1} parent=39 // pred_check
          %p448 = pneg %p45
        $region42: #{decoder_attention_forward.1} parent=39 // pred_check_branch
          %450 = sbr.rel (%p448) target = $region44
        $region43: #{decoder_attention_forward.1} parent=39 // pred_region
          %p451 = scmp.lt.s32.totalorder %s25, 1
          %s452 = scalar_select %p451, %s25, 1
          %s453 = smul.addr %s452, 8
          %s454 = scalar_lea.vmem %s0, %s453
        $region44: #{decoder_attention_forward.1} parent=39 // pred_fallthru
          _
        // Predicated region
        $region45: #{decoder_attention_forward.1} parent=39 // pred_check
          %p455 = pneg %p71
        $region46: #{decoder_attention_forward.1} parent=39 // pred_check_branch
          %457 = sbr.rel (%p455) target = $region48
        $region47: #{decoder_attention_forward.1} parent=39 // pred_region
          %p458 = scmp.lt.s32.totalorder %s25, 1
          %s459 = scalar_select %p458, %s25, 1
          %s460 = smul.addr %s459, 8
          %s461 = scalar_lea.vmem %s1, %s460
        $region48: #{decoder_attention_forward.1} parent=39 // pred_fallthru
          _
        // Predicated region
        $region49: #{decoder_attention_forward.1} parent=39 // pred_check
          %p462 = pneg %p97
        $region50: #{decoder_attention_forward.1} parent=39 // pred_check_branch
          %464 = sbr.rel (%p462) target = $region52
        $region51: #{decoder_attention_forward.1} parent=39 // pred_region
          %s465 = smul.u32 8, %s25
          %p466 = scmp.lt.s32.totalorder %s465, 15
          %s467 = scalar_select %p466, %s465, 15
          %s468 = smul.addr %s467, 4
          %s469 = scalar_lea.vmem %s2, %s468
          %s470 = smul.u32 8, %s25
        $region52: #{decoder_attention_forward.1} parent=39 // pred_fallthru
          _
        // Predicated region
        $region53: #{decoder_attention_forward.1} parent=39 // pred_check
          %p471 = pneg %p123
        $region54: #{decoder_attention_forward.1} parent=39 // pred_check_branch
          %473 = sbr.rel (%p471) target = $region56
        $region55: #{decoder_attention_forward.1} parent=39 // pred_region
          %s474 = smul.u32 8, %s25
          %p475 = scmp.lt.s32.totalorder %s474, 15
          %s476 = scalar_select %p475, %s474, 15
          %s477 = smul.addr %s476, 8
          %s478 = scalar_lea.vmem %s3, %s477
          %s479 = smul.u32 8, %s25
        $region56: #{decoder_attention_forward.1} parent=39 // pred_fallthru
          _
        // Predicated region
        $region57: #{decoder_attention_forward.1} parent=39 // pred_check
          %p480 = pneg %p149
        $region58: #{decoder_attention_forward.1} parent=39 // pred_check_branch
          %482 = sbr.rel (%p480) target = $region60
        $region59: #{decoder_attention_forward.1} parent=39 // pred_region
          %p483 = scmp.lt.s32.totalorder %s25, 1
          %s484 = scalar_select %p483, %s25, 1
          %s485 = smul.addr %s484, 8
          %s486 = scalar_lea.vmem %s4, %s485
        $region60: #{decoder_attention_forward.1} parent=39 // pred_fallthru
          _
        // Predicated region
        $region61: #{decoder_attention_forward.1} parent=39 // pred_check
          %p487 = pneg %p175
        $region62: #{decoder_attention_forward.1} parent=39 // pred_check_branch
          %489 = sbr.rel (%p487) target = $region64
        $region63: #{decoder_attention_forward.1} parent=39 // pred_region
          %p490 = scmp.lt.s32.totalorder %s25, 1
          %s491 = scalar_select %p490, %s25, 1
          %s492 = smul.addr %s491, 8
          %s493 = scalar_lea.vmem %s5, %s492
        $region64: #{decoder_attention_forward.1} parent=39 // pred_fallthru
          _
      $region40: #{decoder_attention_forward.1} parent=5 // pred_fallthru
        _
      %p494 = scmp.le.s32.totalorder 1, %s25
      %p495 = scmp.lt.s32.totalorder %s25, 3
      %p496 = pnand %p494, %p495
      %p497 = pneg %p496
      // Predicated region
      $region65: #{decoder_attention_forward.1} parent=5 // pred_check
        _
      $region66: #{decoder_attention_forward.1} parent=5 // pred_check_branch
        %499 = sbr.rel (%p496) target = $region68
      $region67: #{decoder_attention_forward.1} parent=5 // pred_region
        %s500 = ssub.s32 %s25, 1
        %p501 = scmp.lt.s32.totalorder %s30, 1
        %s502 = scalar_select %p501, %s30, 1
        %s503 = smul.addr %s502, 8
        %s504 = scalar_lea.vmem %s0, %s503
        %p505 = pneg %p51
        %p506 = pneg %p48
        %p507 = scmp.lt.s32.totalorder %s30, 1
        %s508 = scalar_select %p507, %s30, 1
        %s509 = smul.addr %s508, 8
        %s510 = scalar_lea.vmem %s1, %s509
        %p511 = pneg %p77
        %p512 = pneg %p74
        %s513 = smul.u32 8, %s30
        %p514 = scmp.lt.s32.totalorder %s513, 15
        %s515 = scalar_select %p514, %s513, 15
        %s516 = smul.addr %s515, 4
        %s517 = scalar_lea.vmem %s2, %s516
        %p518 = pneg %p103
        %p519 = pneg %p100
        %s520 = smul.u32 8, %s30
        %p521 = scmp.lt.s32.totalorder %s520, 15
        %s522 = scalar_select %p521, %s520, 15
        %s523 = smul.addr %s522, 8
        %s524 = scalar_lea.vmem %s3, %s523
        %p525 = pneg %p129
        %p526 = pneg %p126
        %p527 = scmp.lt.s32.totalorder %s30, 1
        %s528 = scalar_select %p527, %s30, 1
        %s529 = smul.addr %s528, 8
        %s530 = scalar_lea.vmem %s4, %s529
        %p531 = pneg %p155
        %p532 = pneg %p152
        %p533 = scmp.lt.s32.totalorder %s30, 1
        %s534 = scalar_select %p533, %s30, 1
        %s535 = smul.addr %s534, 8
        %s536 = scalar_lea.vmem %s5, %s535
        %p537 = pneg %p181
        %p538 = pneg %p178
        %p539 = pneg %p202
        %p540 = pneg %p199
        %p541 = pneg %p223
        %p542 = pneg %p220
        %p543 = pneg %p244
        %p544 = pneg %p241
        %p545 = pneg %p265
        %p546 = pneg %p262
        %p547 = pneg %p286
        %p548 = pneg %p283
        %p549 = pneg %p307
        %p550 = pneg %p304
        %p551 = pneg %p333
        %p552 = pneg %p330
        %p553 = scmp.lt.s32.totalorder %s30, 1
        %s554 = scalar_select %p553, %s30, 1
        %s555 = smul.addr %s554, 8
        %s556 = scalar_lea.vmem %s12, %s555
        %p557 = pneg %p359
        %p558 = pneg %p356
        %p559 = scmp.lt.s32.totalorder %s30, 1
        %s560 = scalar_select %p559, %s30, 1
        %s561 = smul.addr %s560, 8
        %s562 = scalar_lea.vmem %s13, %s561
        %p563 = pneg %p385
        %p564 = pneg %p382
        %s565 = sand.u32 %s372, 1
        %s566 = scalar_lea.sflag [#allocation3], %s565
        %s567 = sand.u32 %s372, 1
        %s568 = smul.addr %s567, 8
        %s569 = scalar_lea.vmem [#allocation2], %s568
        %p570 = pneg %p411
        %p571 = pneg %p408
        %p572 = scmp.lt.s32.totalorder %s30, 1
        %s573 = scalar_select %p572, %s30, 1
        %s574 = smul.addr %s573, 8
        %s575 = scalar_lea.vmem %s15, %s574
        %p576 = scmp.lt.s32.totalorder %s30, 1
        %s577 = scalar_select %p576, %s30, 1
        %s578 = smul.addr %s577, 8
        %s579 = scalar_lea.vmem %s0, %s578
        %p580 = scmp.lt.s32.totalorder %s30, 1
        %s581 = scalar_select %p580, %s30, 1
        %s582 = smul.addr %s581, 8
        %s583 = scalar_lea.vmem %s1, %s582
        %s584 = smul.u32 8, %s30
        %p585 = scmp.lt.s32.totalorder %s584, 15
        %s586 = scalar_select %p585, %s584, 15
        %s587 = smul.addr %s586, 4
        %s588 = scalar_lea.vmem %s2, %s587
        %s589 = smul.u32 8, %s30
        %s590 = smul.u32 8, %s30
        %p591 = scmp.lt.s32.totalorder %s590, 15
        %s592 = scalar_select %p591, %s590, 15
        %s593 = smul.addr %s592, 8
        %s594 = scalar_lea.vmem %s3, %s593
        %s595 = smul.u32 8, %s30
        %p596 = scmp.lt.s32.totalorder %s30, 1
        %s597 = scalar_select %p596, %s30, 1
        %s598 = smul.addr %s597, 8
        %s599 = scalar_lea.vmem %s4, %s598
        %p600 = scmp.lt.s32.totalorder %s30, 1
        %s601 = scalar_select %p600, %s30, 1
        %s602 = smul.addr %s601, 8
        %s603 = scalar_lea.vmem %s5, %s602
        %p604 = scmp.lt.s32.totalorder %s30, 1
        %s605 = scalar_select %p604, %s30, 1
        %s606 = smul.addr %s605, 8
        %s607 = scalar_lea.vmem %s12, %s606
        %p608 = scmp.lt.s32.totalorder %s30, 1
        %s609 = scalar_select %p608, %s30, 1
        %s610 = smul.addr %s609, 8
        %s611 = scalar_lea.vmem %s13, %s610
        %p612 = scmp.lt.s32.totalorder %s30, 1
        %s613 = scalar_select %p612, %s30, 1
        %s614 = smul.addr %s613, 8
        %s615 = scalar_lea.vmem %s15, %s614
        %v617 = vld [vmem:[%s579] sm:$0xff]
        %v618 = vld [vmem:[%s583] sm:$0xff]
        %v619 = vpack.c.bf16 %v617, %v617
        %v620 = vld [vmem:[%s6] sm:$0xf]
        %v621 = vld [vmem:[%s6 + $0x4] sm:$0xf]
        %v622 = vld [vmem:[%s6 + $0x8] sm:$0xf]
        %v623 = vld [vmem:[%s6 + $0xc] sm:$0xf]
        %v624 = vld [vmem:[%s6 + $0x10] sm:$0xf]
        %v625 = vld [vmem:[%s6 + $0x14] sm:$0xf]
        %v626 = vld [vmem:[%s6 + $0x18] sm:$0xf]
        %v627 = vld [vmem:[%s6 + $0x1c] sm:$0xf]
        %v628 = vld [vmem:[%s7] sm:$0x1]
        %v630 = vlaneseq
        %v631 = vshrl.u32 %v630, 7
        %v632 = vsub.s32 0, %v631
        %v633 = vrot.slane %v628, %v632
        %v643 = vunpack.c.l.b16 %v620
        %v644 = vunpack.c.l.b16 %v621
        %v645 = vunpack.c.l.b16 %v622
        %v646 = vunpack.c.l.b16 %v623
        %v647 = vunpack.c.l.b16 %v624
        %v648 = vunpack.c.l.b16 %v625
        %v649 = vunpack.c.l.b16 %v626
        %v650 = vunpack.c.l.b16 %v627
        %v651 = vpack.c.b16 %v644, %v643
        %v652 = vpack.c.b16 %v646, %v645
        %v653 = vpack.c.b16 %v648, %v647
        %v654 = vpack.c.b16 %v650, %v649
        %vm659 = vcmask 523264
        %v661 = vsel %vm659, %v619, 0
        %663 = vmatprep.subr.bf16.mxu0 0
        %664 = vmatpush1.bf16.msra.mxu0 %v651
        %665 = vmatprep.subr.bf16.mxu0 0
        %666 = vmatpush1.bf16.msra.mxu0 %v652
        %667 = vmatprep.subr.bf16.mxu0 0
        %668 = vmatpush1.bf16.msra.mxu0 %v653
        %669 = vmatprep.subr.bf16.mxu0 0
        %670 = vmatpush1.bf16.msra.mxu0 %v654
        %671 = vmatprep.subr.bf16.mxu0 0
        %672 = vmatpush1.bf16.msra.mxu0 0
        %673 = vmatprep.subr.bf16.mxu0 0
        %674 = vmatpush1.bf16.msra.mxu0 0
        %675 = vmatprep.subr.bf16.mxu0 0
        %676 = vmatpush1.bf16.msra.mxu0 0
        %677 = vmatprep.subr.bf16.mxu0 0
        %678 = vmatpush1.bf16.msra.mxu0 0
        %679 = vmatprep.subr.bf16.mxu0 0
        %680 = vmatpush1.bf16.msra.mxu0 0
        %681 = vmatprep.subr.bf16.mxu0 0
        %682 = vmatpush1.bf16.msra.mxu0 0
        %683 = vmatprep.subr.bf16.mxu0 0
        %684 = vmatpush1.bf16.msra.mxu0 0
        %685 = vmatprep.subr.bf16.mxu0 0
        %686 = vmatpush1.bf16.msra.mxu0 0
        %687 = vmatprep.subr.bf16.mxu0 0
        %688 = vmatpush1.bf16.msra.mxu0 0
        %689 = vmatprep.subr.bf16.mxu0 0
        %690 = vmatpush1.bf16.msra.mxu0 0
        %691 = vmatprep.subr.bf16.mxu0 0
        %692 = vmatpush1.bf16.msra.mxu0 0
        %693 = vmatprep.subr.bf16.mxu0 0
        %694 = vmatpush1.bf16.msra.mxu0 0
        %695 = vmatprep.mubr.bf16.mxu0 0
        %696 = vmatmul.mubr.bf16.gmra.mrb[0].mxu0 %v661
        %v697 = vpop.f32.mrb[0].mxu0
        %v698 = vadd.f32 %v633, %v697
        %v699 = vpop.f32.mrb[0].mxu0
        %v700 = vpop.f32.mrb[0].mxu0
        %v701 = vpop.f32.mrb[0].mxu0
        %702 = vdwg.mxu0
        %v703 = vsub.f32 0.0, %v698
        %v704 = vmul.f32 %v703, 1.442695
        %v705 = vpow.pop %v704
        %v706 = vadd.f32 %v705, 1.0
        %v707 = vrcp.pop %v706
        %v708 = vmul.f32 1.0, %v707
        %v709 = vtanh.pop %v698
        %711 = vrot.lane.b32.xlu0 %v618, 32
        %v712 = vpop.permute.xlu0 %711
        %v714 = vmul.f32 %v708, %v712
        %716 = vrot.lane.b32.xlu0 %v709, 64
        %v717 = vpop.permute.xlu0 %716
        %v719 = vmul.f32 %v708, %v717
        %721 = vrot.lane.b32.xlu0 %v719, 32
        %v722 = vpop.permute.xlu0 %721
        %v724 = vadd.f32 %v714, %v722
        %v725 = vtanh.pop %v724
        %727 = vrot.lane.b32.xlu0 %v725, 64
        %v728 = vpop.permute.xlu0 %727
        %v730 = vmul.f32 %v708, %v728
        %732 = vrot.lane.b32.xlu0 %v730, 32
        %v733 = vpop.permute.xlu0 %732
        %vm735 = vcmask 261120
        %736 = vst.msk [vmem:[%s569] sm:$0xff] %vm735, %v733
        %738 = vrot.lane.b32.xlu0 %v724, 96
        %v739 = vpop.permute.xlu0 %738
        %741 = vst.msk [vmem:[%s615] sm:$0xff] %vm735, %v739
        %v742 = vpack.c.bf16 %v730, %v730
        %v743 = vld [vmem:[%s8] sm:$0xf]
        %v744 = vld [vmem:[%s8 + $0x4] sm:$0xf]
        %v745 = vld [vmem:[%s8 + $0x8] sm:$0xf]
        %v746 = vld [vmem:[%s8 + $0xc] sm:$0xf]
        %748 = vrot.lane.b32.xlu0 %v742, 32
        %v749 = vpop.permute.xlu0 %748
        %v754 = vunpack.c.l.b16 %v743
        %v755 = vunpack.c.l.b16 %v744
        %v756 = vunpack.c.l.b16 %v745
        %v757 = vunpack.c.l.b16 %v746
        %v758 = vpack.c.b16 %v755, %v754
        %v759 = vpack.c.b16 %v757, %v756
        %v763 = vsel %vm735, %v749, 0
        %765 = vmatprep.subr.bf16.mxu0 0
        %766 = vmatpush1.bf16.msra.mxu0 %v758
        %767 = vmatprep.subr.bf16.mxu0 0
        %768 = vmatpush1.bf16.msra.mxu0 %v759
        %769 = vmatprep.subr.bf16.mxu0 0
        %770 = vmatpush1.bf16.msra.mxu0 0
        %771 = vmatprep.subr.bf16.mxu0 0
        %772 = vmatpush1.bf16.msra.mxu0 0
        %773 = vmatprep.subr.bf16.mxu0 0
        %774 = vmatpush1.bf16.msra.mxu0 0
        %775 = vmatprep.subr.bf16.mxu0 0
        %776 = vmatpush1.bf16.msra.mxu0 0
        %777 = vmatprep.subr.bf16.mxu0 0
        %778 = vmatpush1.bf16.msra.mxu0 0
        %779 = vmatprep.subr.bf16.mxu0 0
        %780 = vmatpush1.bf16.msra.mxu0 0
        %781 = vmatprep.subr.bf16.mxu0 0
        %782 = vmatpush1.bf16.msra.mxu0 0
        %783 = vmatprep.subr.bf16.mxu0 0
        %784 = vmatpush1.bf16.msra.mxu0 0
        %785 = vmatprep.subr.bf16.mxu0 0
        %786 = vmatpush1.bf16.msra.mxu0 0
        %787 = vmatprep.subr.bf16.mxu0 0
        %788 = vmatpush1.bf16.msra.mxu0 0
        %789 = vmatprep.subr.bf16.mxu0 0
        %790 = vmatpush1.bf16.msra.mxu0 0
        %791 = vmatprep.subr.bf16.mxu0 0
        %792 = vmatpush1.bf16.msra.mxu0 0
        %793 = vmatprep.subr.bf16.mxu0 0
        %794 = vmatpush1.bf16.msra.mxu0 0
        %795 = vmatprep.subr.bf16.mxu0 0
        %796 = vmatpush1.bf16.msra.mxu0 0
        %797 = vmatprep.mubr.bf16.mxu0 0
        %798 = vmatmul.mubr.bf16.gmra.mrb[0].mxu0 %v763
        %v799 = vpop.f32.mrb[0].mxu0
        %v800 = vadd.f32 0.0, %v799
        %v801 = vpop.f32.mrb[0].mxu0
        %v802 = vpop.f32.mrb[0].mxu0
        %v803 = vpop.f32.mrb[0].mxu0
        %804 = vdwg.mxu0
        %v806 = vcombine.high %v800, %v800
        %v808 = vunpack.c.l.s4 1966171168
        %v809 = vunpack.c.0.s8 %v808
        %v810 = vlaneseq
        %v811 = vshrl.u32 %v810, 7
        %v812 = vsub.s32 %v809, %v811
        %v813 = vrot.slane %v800, %v812
        %v815 = vunpack.c.l.s4 1966171168
        %v816 = vunpack.c.0.s8 %v815
        %v817 = vlaneseq
        %v818 = vshrl.u32 %v817, 7
        %v819 = vsub.s32 %v816, %v818
        %v820 = vrot.slane %v806, %v819
        %v821 = vcombine.high %v813, %v813
        %v822 = vcombine.high %v820, %v820
        %v824 = vunpack.c.l.s4 1966171168
        %v825 = vunpack.c.0.s8 %v824
        %v826 = vlaneseq
        %v827 = vshrl.u32 %v826, 7
        %v828 = vsub.s32 %v825, %v827
        %v829 = vrot.slane %v813, %v828
        %v831 = vunpack.c.l.s4 1966171168
        %v832 = vunpack.c.0.s8 %v831
        %v833 = vlaneseq
        %v834 = vshrl.u32 %v833, 7
        %v835 = vsub.s32 %v832, %v834
        %v836 = vrot.slane %v820, %v835
        %v838 = vunpack.c.l.s4 1966171168
        %v839 = vunpack.c.0.s8 %v838
        %v840 = vlaneseq
        %v841 = vshrl.u32 %v840, 7
        %v842 = vsub.s32 %v839, %v841
        %v843 = vrot.slane %v821, %v842
        %v845 = vunpack.c.l.s4 1966171168
        %v846 = vunpack.c.0.s8 %v845
        %v847 = vlaneseq
        %v848 = vshrl.u32 %v847, 7
        %v849 = vsub.s32 %v846, %v848
        %v850 = vrot.slane %v822, %v849
        %v851 = vcombine.high %v829, %v829
        %v852 = vcombine.high %v836, %v836
        %v853 = vcombine.high %v843, %v843
        %v854 = vcombine.high %v850, %v850
        %v855 = vld [vmem:[%s594] sm:$0xff]
        %v856 = vld [vmem:[%s594 + $0x8] sm:$0xff]
        %v857 = vld [vmem:[%s594 + $0x10] sm:$0xff]
        %v858 = vld [vmem:[%s594 + $0x18] sm:$0xff]
        %v859 = vld [vmem:[%s594 + $0x20] sm:$0xff]
        %v860 = vld [vmem:[%s594 + $0x28] sm:$0xff]
        %v861 = vld [vmem:[%s594 + $0x30] sm:$0xff]
        %v862 = vld [vmem:[%s594 + $0x38] sm:$0xff]
        %v863 = vlaneseq
        %v864 = vshrl.u32 %v863, 7
        %v865 = vsub.s32 0, %v864
        %v866 = vrot.slane %v829, %v865
        %v867 = vlaneseq
        %v868 = vshrl.u32 %v867, 7
        %v869 = vsub.s32 0, %v868
        %v870 = vrot.slane %v843, %v869
        %v871 = vlaneseq
        %v872 = vshrl.u32 %v871, 7
        %v873 = vsub.s32 0, %v872
        %v874 = vrot.slane %v851, %v873
        %v875 = vlaneseq
        %v876 = vshrl.u32 %v875, 7
        %v877 = vsub.s32 0, %v876
        %v878 = vrot.slane %v853, %v877
        %v879 = vlaneseq
        %v880 = vshrl.u32 %v879, 7
        %v881 = vsub.s32 0, %v880
        %v882 = vrot.slane %v836, %v881
        %v883 = vlaneseq
        %v884 = vshrl.u32 %v883, 7
        %v885 = vsub.s32 0, %v884
        %v886 = vrot.slane %v850, %v885
        %v887 = vlaneseq
        %v888 = vshrl.u32 %v887, 7
        %v889 = vsub.s32 0, %v888
        %v890 = vrot.slane %v852, %v889
        %v891 = vlaneseq
        %v892 = vshrl.u32 %v891, 7
        %v893 = vsub.s32 0, %v892
        %v894 = vrot.slane %v854, %v893
        %v903 = vadd.f32 %v866, %v855
        %v904 = vadd.f32 %v870, %v856
        %v905 = vadd.f32 %v874, %v857
        %v906 = vadd.f32 %v878, %v858
        %v907 = vadd.f32 %v882, %v859
        %v908 = vadd.f32 %v886, %v860
        %v909 = vadd.f32 %v890, %v861
        %v910 = vadd.f32 %v894, %v862
        %v911 = vtanh.pop %v903
        %v912 = vtanh.pop %v904
        %v913 = vtanh.pop %v905
        %v914 = vtanh.pop %v906
        %v915 = vtanh.pop %v907
        %v916 = vtanh.pop %v908
        %v917 = vtanh.pop %v909
        %v918 = vtanh.pop %v910
        %v919 = vld [vmem:[%s9] sm:$0x1]
        %v921 = vlaneseq
        %v922 = vshrl.u32 %v921, 7
        %v923 = vsub.s32 0, %v922
        %v924 = vrot.slane %v919, %v923
        %v926 = vmul.f32 %v911, %v924
        %v927 = vmul.f32 %v912, %v924
        %v928 = vmul.f32 %v913, %v924
        %v929 = vmul.f32 %v914, %v924
        %v930 = vmul.f32 %v915, %v924
        %v931 = vmul.f32 %v916, %v924
        %v932 = vmul.f32 %v917, %v924
        %v933 = vmul.f32 %v918, %v924
        %v934 = vsel %vm735, %v926, 0.0
        %935 = vadd.xlane.f32.xlu0 %v934
        %v936 = vpop.xlane.xlu0 %935
        %v937 = vsel %vm735, %v927, 0.0
        %938 = vadd.xlane.f32.xlu0 %v937
        %v939 = vpop.xlane.xlu0 %938
        %v940 = vsel %vm735, %v928, 0.0
        %941 = vadd.xlane.f32.xlu0 %v940
        %v942 = vpop.xlane.xlu0 %941
        %v943 = vsel %vm735, %v929, 0.0
        %944 = vadd.xlane.f32.xlu0 %v943
        %v945 = vpop.xlane.xlu0 %944
        %v946 = vsel %vm735, %v930, 0.0
        %947 = vadd.xlane.f32.xlu0 %v946
        %v948 = vpop.xlane.xlu0 %947
        %v949 = vsel %vm735, %v931, 0.0
        %950 = vadd.xlane.f32.xlu0 %v949
        %v951 = vpop.xlane.xlu0 %950
        %v952 = vsel %vm735, %v932, 0.0
        %953 = vadd.xlane.f32.xlu0 %v952
        %v954 = vpop.xlane.xlu0 %953
        %v955 = vsel %vm735, %v933, 0.0
        %956 = vadd.xlane.f32.xlu0 %v955
        %v957 = vpop.xlane.xlu0 %956
        %v958 = vld [vmem:[%s599] sm:$0xff]
        %v960 = vlaneseq
        %v961 = vshrl.u32 %v960, 7
        %v962 = vsub.s32 0, %v961
        %v963 = vrot.slane %v958, %v962
        %965 = vbcast.lane.b32.xlu0 %v963, 256
        %v966 = vpop.permute.xlu0 %965
        %v967 = vlaneseq
        %v968 = vshrl.u32 %v967, 7
        %v969 = vsub.s32 1, %v968
        %v970 = vrot.slane %v958, %v969
        %972 = vbcast.lane.b32.xlu0 %v970, 256
        %v973 = vpop.permute.xlu0 %972
        %v974 = vlaneseq
        %v975 = vshrl.u32 %v974, 7
        %v976 = vsub.s32 2, %v975
        %v977 = vrot.slane %v958, %v976
        %979 = vbcast.lane.b32.xlu0 %v977, 256
        %v980 = vpop.permute.xlu0 %979
        %v981 = vlaneseq
        %v982 = vshrl.u32 %v981, 7
        %v983 = vsub.s32 3, %v982
        %v984 = vrot.slane %v958, %v983
        %986 = vbcast.lane.b32.xlu0 %v984, 256
        %v987 = vpop.permute.xlu0 %986
        %v988 = vlaneseq
        %v989 = vshrl.u32 %v988, 7
        %v990 = vsub.s32 4, %v989
        %v991 = vrot.slane %v958, %v990
        %993 = vbcast.lane.b32.xlu0 %v991, 256
        %v994 = vpop.permute.xlu0 %993
        %v995 = vlaneseq
        %v996 = vshrl.u32 %v995, 7
        %v997 = vsub.s32 5, %v996
        %v998 = vrot.slane %v958, %v997
        %1000 = vbcast.lane.b32.xlu0 %v998, 256
        %v1001 = vpop.permute.xlu0 %1000
        %v1002 = vlaneseq
        %v1003 = vshrl.u32 %v1002, 7
        %v1004 = vsub.s32 6, %v1003
        %v1005 = vrot.slane %v958, %v1004
        %1007 = vbcast.lane.b32.xlu0 %v1005, 256
        %v1008 = vpop.permute.xlu0 %1007
        %v1009 = vlaneseq
        %v1010 = vshrl.u32 %v1009, 7
        %v1011 = vsub.s32 7, %v1010
        %v1012 = vrot.slane %v958, %v1011
        %1014 = vbcast.lane.b32.xlu0 %v1012, 256
        %v1015 = vpop.permute.xlu0 %1014
        %v1024 = vadd.f32 %v936, %v966
        %v1025 = vadd.f32 %v939, %v973
        %v1026 = vadd.f32 %v942, %v980
        %v1027 = vadd.f32 %v945, %v987
        %v1028 = vadd.f32 %v948, %v994
        %v1029 = vadd.f32 %v951, %v1001
        %v1030 = vadd.f32 %v954, %v1008
        %v1031 = vadd.f32 %v957, %v1015
        %1040 = vset.pattern.permute.xlu0 0
        %1041 = vperm.xlu0 %1040, %v1024
        %v1042 = vpop.permute.xlu0 %1041
        %1043 = vset.pattern.permute.xlu0 0
        %1044 = vperm.xlu0 %1043, %v1025
        %v1045 = vpop.permute.xlu0 %1044
        %1046 = vset.pattern.permute.xlu0 0
        %1047 = vperm.xlu0 %1046, %v1026
        %v1048 = vpop.permute.xlu0 %1047
        %1049 = vset.pattern.permute.xlu0 0
        %1050 = vperm.xlu0 %1049, %v1027
        %v1051 = vpop.permute.xlu0 %1050
        %1052 = vset.pattern.permute.xlu0 0
        %1053 = vperm.xlu0 %1052, %v1028
        %v1054 = vpop.permute.xlu0 %1053
        %1055 = vset.pattern.permute.xlu0 0
        %1056 = vperm.xlu0 %1055, %v1029
        %v1057 = vpop.permute.xlu0 %1056
        %1058 = vset.pattern.permute.xlu0 0
        %1059 = vperm.xlu0 %1058, %v1030
        %v1060 = vpop.permute.xlu0 %1059
        %1061 = vset.pattern.permute.xlu0 0
        %1062 = vperm.xlu0 %1061, %v1031
        %v1063 = vpop.permute.xlu0 %1062
        %v1064 = vlaneseq
        %v1065 = vand.u32 %v1064, 127
        %v1066 = vlaneseq
        %v1067 = vshrl.u32 %v1066, 7
        %v1068 = vsub.s32 %v1065, %v1067
        %v1069 = vrot.slane %v1042, %v1068
        %v1070 = vlaneseq
        %v1071 = vshrl.u32 %v1070, 7
        %v1072 = vsub.s32 %v1065, %v1071
        %v1073 = vrot.slane %v1045, %v1072
        %v1074 = vlaneseq
        %v1075 = vshrl.u32 %v1074, 7
        %v1076 = vsub.s32 %v1065, %v1075
        %v1077 = vrot.slane %v1048, %v1076
        %v1078 = vlaneseq
        %v1079 = vshrl.u32 %v1078, 7
        %v1080 = vsub.s32 %v1065, %v1079
        %v1081 = vrot.slane %v1051, %v1080
        %v1082 = vlaneseq
        %v1083 = vshrl.u32 %v1082, 7
        %v1084 = vsub.s32 %v1065, %v1083
        %v1085 = vrot.slane %v1054, %v1084
        %v1086 = vlaneseq
        %v1087 = vshrl.u32 %v1086, 7
        %v1088 = vsub.s32 %v1065, %v1087
        %v1089 = vrot.slane %v1057, %v1088
        %v1090 = vlaneseq
        %v1091 = vshrl.u32 %v1090, 7
        %v1092 = vsub.s32 %v1065, %v1091
        %v1093 = vrot.slane %v1060, %v1092
        %v1094 = vlaneseq
        %v1095 = vshrl.u32 %v1094, 7
        %v1096 = vsub.s32 %v1065, %v1095
        %v1097 = vrot.slane %v1063, %v1096
        %vm1098 = vcmask 1041409
        %v1099 = vsel %vm1098, %v1073, %v1069
        %vm1100 = vcmask 1042434
        %v1101 = vsel %vm1100, %v1077, %v1099
        %vm1102 = vcmask 1043459
        %v1103 = vsel %vm1102, %v1081, %v1101
        %vm1104 = vcmask 1044484
        %v1105 = vsel %vm1104, %v1085, %v1103
        %vm1106 = vcmask 1045509
        %v1107 = vsel %vm1106, %v1089, %v1105
        %vm1108 = vcmask 1046534
        %v1109 = vsel %vm1108, %v1093, %v1107
        %vm1110 = vcmask 1047559
        %v1111 = vsel %vm1110, %v1097, %v1109
        %vm1113 = vcmask 64512
        %v1114 = vsel %vm1113, %v1111, -inf
        %1115 = vmax.xlane.f32.xlu0 %v1114
        %v1116 = vpop.xlane.xlu0 %1115
        %v1118 = vlaneseq
        %v1119 = vshrl.u32 %v1118, 7
        %v1120 = vsub.s32 0, %v1119
        %v1121 = vrot.slane %v1116, %v1120
        %v1122 = vlaneseq
        %v1123 = vshrl.u32 %v1122, 7
        %v1124 = vsub.s32 1, %v1123
        %v1125 = vrot.slane %v1116, %v1124
        %v1126 = vlaneseq
        %v1127 = vshrl.u32 %v1126, 7
        %v1128 = vsub.s32 2, %v1127
        %v1129 = vrot.slane %v1116, %v1128
        %v1130 = vlaneseq
        %v1131 = vshrl.u32 %v1130, 7
        %v1132 = vsub.s32 3, %v1131
        %v1133 = vrot.slane %v1116, %v1132
        %v1134 = vlaneseq
        %v1135 = vshrl.u32 %v1134, 7
        %v1136 = vsub.s32 4, %v1135
        %v1137 = vrot.slane %v1116, %v1136
        %v1138 = vlaneseq
        %v1139 = vshrl.u32 %v1138, 7
        %v1140 = vsub.s32 5, %v1139
        %v1141 = vrot.slane %v1116, %v1140
        %v1142 = vlaneseq
        %v1143 = vshrl.u32 %v1142, 7
        %v1144 = vsub.s32 6, %v1143
        %v1145 = vrot.slane %v1116, %v1144
        %v1146 = vlaneseq
        %v1147 = vshrl.u32 %v1146, 7
        %v1148 = vsub.s32 7, %v1147
        %v1149 = vrot.slane %v1116, %v1148
        %v1158 = vsub.f32 %v1024, %v1121
        %v1159 = vsub.f32 %v1025, %v1125
        %v1160 = vsub.f32 %v1026, %v1129
        %v1161 = vsub.f32 %v1027, %v1133
        %v1162 = vsub.f32 %v1028, %v1137
        %v1163 = vsub.f32 %v1029, %v1141
        %v1164 = vsub.f32 %v1030, %v1145
        %v1165 = vsub.f32 %v1031, %v1149
        %v1166 = vmul.f32 %v1158, 1.442695
        %v1167 = vpow.pop %v1166
        %v1168 = vmul.f32 %v1159, 1.442695
        %v1169 = vpow.pop %v1168
        %v1170 = vmul.f32 %v1160, 1.442695
        %v1171 = vpow.pop %v1170
        %v1172 = vmul.f32 %v1161, 1.442695
        %v1173 = vpow.pop %v1172
        %v1174 = vmul.f32 %v1162, 1.442695
        %v1175 = vpow.pop %v1174
        %v1176 = vmul.f32 %v1163, 1.442695
        %v1177 = vpow.pop %v1176
        %v1178 = vmul.f32 %v1164, 1.442695
        %v1179 = vpow.pop %v1178
        %v1180 = vmul.f32 %v1165, 1.442695
        %v1181 = vpow.pop %v1180
        %1190 = vset.pattern.permute.xlu0 0
        %1191 = vperm.xlu0 %1190, %v1167
        %v1192 = vpop.permute.xlu0 %1191
        %1193 = vset.pattern.permute.xlu0 0
        %1194 = vperm.xlu0 %1193, %v1169
        %v1195 = vpop.permute.xlu0 %1194
        %1196 = vset.pattern.permute.xlu0 0
        %1197 = vperm.xlu0 %1196, %v1171
        %v1198 = vpop.permute.xlu0 %1197
        %1199 = vset.pattern.permute.xlu0 0
        %1200 = vperm.xlu0 %1199, %v1173
        %v1201 = vpop.permute.xlu0 %1200
        %1202 = vset.pattern.permute.xlu0 0
        %1203 = vperm.xlu0 %1202, %v1175
        %v1204 = vpop.permute.xlu0 %1203
        %1205 = vset.pattern.permute.xlu0 0
        %1206 = vperm.xlu0 %1205, %v1177
        %v1207 = vpop.permute.xlu0 %1206
        %1208 = vset.pattern.permute.xlu0 0
        %1209 = vperm.xlu0 %1208, %v1179
        %v1210 = vpop.permute.xlu0 %1209
        %1211 = vset.pattern.permute.xlu0 0
        %1212 = vperm.xlu0 %1211, %v1181
        %v1213 = vpop.permute.xlu0 %1212
        %v1214 = vlaneseq
        %v1215 = vshrl.u32 %v1214, 7
        %v1216 = vsub.s32 %v1065, %v1215
        %v1217 = vrot.slane %v1192, %v1216
        %v1218 = vlaneseq
        %v1219 = vshrl.u32 %v1218, 7
        %v1220 = vsub.s32 %v1065, %v1219
        %v1221 = vrot.slane %v1195, %v1220
        %v1222 = vlaneseq
        %v1223 = vshrl.u32 %v1222, 7
        %v1224 = vsub.s32 %v1065, %v1223
        %v1225 = vrot.slane %v1198, %v1224
        %v1226 = vlaneseq
        %v1227 = vshrl.u32 %v1226, 7
        %v1228 = vsub.s32 %v1065, %v1227
        %v1229 = vrot.slane %v1201, %v1228
        %v1230 = vlaneseq
        %v1231 = vshrl.u32 %v1230, 7
        %v1232 = vsub.s32 %v1065, %v1231
        %v1233 = vrot.slane %v1204, %v1232
        %v1234 = vlaneseq
        %v1235 = vshrl.u32 %v1234, 7
        %v1236 = vsub.s32 %v1065, %v1235
        %v1237 = vrot.slane %v1207, %v1236
        %v1238 = vlaneseq
        %v1239 = vshrl.u32 %v1238, 7
        %v1240 = vsub.s32 %v1065, %v1239
        %v1241 = vrot.slane %v1210, %v1240
        %v1242 = vlaneseq
        %v1243 = vshrl.u32 %v1242, 7
        %v1244 = vsub.s32 %v1065, %v1243
        %v1245 = vrot.slane %v1213, %v1244
        %v1246 = vsel %vm1098, %v1221, %v1217
        %v1247 = vsel %vm1100, %v1225, %v1246
        %v1248 = vsel %vm1102, %v1229, %v1247
        %v1249 = vsel %vm1104, %v1233, %v1248
        %v1250 = vsel %vm1106, %v1237, %v1249
        %v1251 = vsel %vm1108, %v1241, %v1250
        %v1252 = vsel %vm1110, %v1245, %v1251
        %v1254 = vsel %vm1113, %v1252, 0.0
        %1255 = vadd.xlane.f32.xlu0 %v1254
        %v1256 = vpop.xlane.xlu0 %1255
        %v1257 = vrcp.pop %v1256
        %v1259 = vlaneseq
        %v1260 = vshrl.u32 %v1259, 7
        %v1261 = vsub.s32 0, %v1260
        %v1262 = vrot.slane %v1257, %v1261
        %v1263 = vlaneseq
        %v1264 = vshrl.u32 %v1263, 7
        %v1265 = vsub.s32 1, %v1264
        %v1266 = vrot.slane %v1257, %v1265
        %v1267 = vlaneseq
        %v1268 = vshrl.u32 %v1267, 7
        %v1269 = vsub.s32 2, %v1268
        %v1270 = vrot.slane %v1257, %v1269
        %v1271 = vlaneseq
        %v1272 = vshrl.u32 %v1271, 7
        %v1273 = vsub.s32 3, %v1272
        %v1274 = vrot.slane %v1257, %v1273
        %v1275 = vlaneseq
        %v1276 = vshrl.u32 %v1275, 7
        %v1277 = vsub.s32 4, %v1276
        %v1278 = vrot.slane %v1257, %v1277
        %v1279 = vlaneseq
        %v1280 = vshrl.u32 %v1279, 7
        %v1281 = vsub.s32 5, %v1280
        %v1282 = vrot.slane %v1257, %v1281
        %v1283 = vlaneseq
        %v1284 = vshrl.u32 %v1283, 7
        %v1285 = vsub.s32 6, %v1284
        %v1286 = vrot.slane %v1257, %v1285
        %v1287 = vlaneseq
        %v1288 = vshrl.u32 %v1287, 7
        %v1289 = vsub.s32 7, %v1288
        %v1290 = vrot.slane %v1257, %v1289
        %v1299 = vmul.f32 %v1167, %v1262
        %v1300 = vmul.f32 %v1169, %v1266
        %v1301 = vmul.f32 %v1171, %v1270
        %v1302 = vmul.f32 %v1173, %v1274
        %v1303 = vmul.f32 %v1175, %v1278
        %v1304 = vmul.f32 %v1177, %v1282
        %v1305 = vmul.f32 %v1179, %v1286
        %v1306 = vmul.f32 %v1181, %v1290
        %v1307 = vlog2.pop %v1256
        %v1308 = vmul.f32 %v1307, 0.6931472
        %v1310 = vlaneseq
        %v1311 = vshrl.u32 %v1310, 7
        %v1312 = vsub.s32 0, %v1311
        %v1313 = vrot.slane %v1308, %v1312
        %v1314 = vlaneseq
        %v1315 = vshrl.u32 %v1314, 7
        %v1316 = vsub.s32 1, %v1315
        %v1317 = vrot.slane %v1308, %v1316
        %v1318 = vlaneseq
        %v1319 = vshrl.u32 %v1318, 7
        %v1320 = vsub.s32 2, %v1319
        %v1321 = vrot.slane %v1308, %v1320
        %v1322 = vlaneseq
        %v1323 = vshrl.u32 %v1322, 7
        %v1324 = vsub.s32 3, %v1323
        %v1325 = vrot.slane %v1308, %v1324
        %v1326 = vlaneseq
        %v1327 = vshrl.u32 %v1326, 7
        %v1328 = vsub.s32 4, %v1327
        %v1329 = vrot.slane %v1308, %v1328
        %v1330 = vlaneseq
        %v1331 = vshrl.u32 %v1330, 7
        %v1332 = vsub.s32 5, %v1331
        %v1333 = vrot.slane %v1308, %v1332
        %v1334 = vlaneseq
        %v1335 = vshrl.u32 %v1334, 7
        %v1336 = vsub.s32 6, %v1335
        %v1337 = vrot.slane %v1308, %v1336
        %v1338 = vlaneseq
        %v1339 = vshrl.u32 %v1338, 7
        %v1340 = vsub.s32 7, %v1339
        %v1341 = vrot.slane %v1308, %v1340
        %v1350 = vsub.f32 %v1158, %v1313
        %v1351 = vsub.f32 %v1159, %v1317
        %v1352 = vsub.f32 %v1160, %v1321
        %v1353 = vsub.f32 %v1161, %v1325
        %v1354 = vsub.f32 %v1162, %v1329
        %v1355 = vsub.f32 %v1163, %v1333
        %v1356 = vsub.f32 %v1164, %v1337
        %v1357 = vsub.f32 %v1165, %v1341
        %v1358 = vpack.c.bf16 %v1299, %v1299
        %v1359 = vpack.c.bf16 %v1300, %v1300
        %v1360 = vpack.c.bf16 %v1301, %v1301
        %v1361 = vpack.c.bf16 %v1302, %v1302
        %v1362 = vpack.c.bf16 %v1303, %v1303
        %v1363 = vpack.c.bf16 %v1304, %v1304
        %v1364 = vpack.c.bf16 %v1305, %v1305
        %v1365 = vpack.c.bf16 %v1306, %v1306
        %v1366 = vld [vmem:[%s588] sm:$0xf]
        %v1367 = vld [vmem:[%s588 + $0x4] sm:$0xf]
        %v1368 = vld [vmem:[%s588 + $0x8] sm:$0xf]
        %v1369 = vld [vmem:[%s588 + $0xc] sm:$0xf]
        %v1370 = vld [vmem:[%s588 + $0x10] sm:$0xf]
        %v1371 = vld [vmem:[%s588 + $0x14] sm:$0xf]
        %v1372 = vld [vmem:[%s588 + $0x18] sm:$0xf]
        %v1373 = vld [vmem:[%s588 + $0x1c] sm:$0xf]
        %v1375 = vunpack.c.l.b16 %v1358
        %1376 = vset.pattern.permute.xlu0 0
        %1377 = vperm.xlu0 %1376, %v1375
        %v1378 = vpop.permute.xlu0 %1377
        %v1379 = vlaneseq
        %v1380 = vshrl.u32 %v1379, 7
        %v1381 = vsub.s32 %v1065, %v1380
        %v1382 = vrot.slane %v1378, %v1381
        %v1383 = vpack.c.b16 %v1382, %v1382
        %v1385 = vsel %vm1113, %v1383, 0
        %vm1387 = vcmask 1043456
        %v1389 = vsel %vm1387, %v1366, 0
        %1391 = vmatprep.subr.bf16.mxu0 0
        %1392 = vmatpush1.bf16.msra.mxu0 %v1389
        %1393 = vmatprep.subr.bf16.mxu0 0
        %1394 = vmatpush1.bf16.msra.mxu0 0
        %1395 = vmatprep.subr.bf16.mxu0 0
        %1396 = vmatpush1.bf16.msra.mxu0 0
        %1397 = vmatprep.subr.bf16.mxu0 0
        %1398 = vmatpush1.bf16.msra.mxu0 0
        %1399 = vmatprep.subr.bf16.mxu0 0
        %1400 = vmatpush1.bf16.msra.mxu0 0
        %1401 = vmatprep.subr.bf16.mxu0 0
        %1402 = vmatpush1.bf16.msra.mxu0 0
        %1403 = vmatprep.subr.bf16.mxu0 0
        %1404 = vmatpush1.bf16.msra.mxu0 0
        %1405 = vmatprep.subr.bf16.mxu0 0
        %1406 = vmatpush1.bf16.msra.mxu0 0
        %1407 = vmatprep.subr.bf16.mxu0 0
        %1408 = vmatpush1.bf16.msra.mxu0 0
        %1409 = vmatprep.subr.bf16.mxu0 0
        %1410 = vmatpush1.bf16.msra.mxu0 0
        %1411 = vmatprep.subr.bf16.mxu0 0
        %1412 = vmatpush1.bf16.msra.mxu0 0
        %1413 = vmatprep.subr.bf16.mxu0 0
        %1414 = vmatpush1.bf16.msra.mxu0 0
        %1415 = vmatprep.subr.bf16.mxu0 0
        %1416 = vmatpush1.bf16.msra.mxu0 0
        %1417 = vmatprep.subr.bf16.mxu0 0
        %1418 = vmatpush1.bf16.msra.mxu0 0
        %1419 = vmatprep.subr.bf16.mxu0 0
        %1420 = vmatpush1.bf16.msra.mxu0 0
        %1421 = vmatprep.subr.bf16.mxu0 0
        %1422 = vmatpush1.bf16.msra.mxu0 0
        %1423 = vmatprep.mubr.bf16.mxu0 0
        %1424 = vmatmul.mubr.bf16.gmra.mrb[0].mxu0 %v1385
        %v1425 = vpop.f32.mrb[0].mxu0
        %v1426 = vadd.f32 0.0, %v1425
        %v1427 = vpop.f32.mrb[0].mxu0
        %v1428 = vpop.f32.mrb[0].mxu0
        %v1429 = vpop.f32.mrb[0].mxu0
        %1430 = vdwg.mxu0
        %v1432 = vunpack.c.l.b16 %v1359
        %1433 = vset.pattern.permute.xlu0 0
        %1434 = vperm.xlu0 %1433, %v1432
        %v1435 = vpop.permute.xlu0 %1434
        %v1436 = vlaneseq
        %v1437 = vshrl.u32 %v1436, 7
        %v1438 = vsub.s32 %v1065, %v1437
        %v1439 = vrot.slane %v1435, %v1438
        %v1440 = vpack.c.b16 %v1439, %v1439
        %v1442 = vsel %vm1113, %v1440, 0
        %v1445 = vsel %vm1387, %v1367, 0
        %1447 = vmatprep.subr.bf16.mxu0 0
        %1448 = vmatpush1.bf16.msra.mxu0 %v1445
        %1449 = vmatprep.subr.bf16.mxu0 0
        %1450 = vmatpush1.bf16.msra.mxu0 0
        %1451 = vmatprep.subr.bf16.mxu0 0
        %1452 = vmatpush1.bf16.msra.mxu0 0
        %1453 = vmatprep.subr.bf16.mxu0 0
        %1454 = vmatpush1.bf16.msra.mxu0 0
        %1455 = vmatprep.subr.bf16.mxu0 0
        %1456 = vmatpush1.bf16.msra.mxu0 0
        %1457 = vmatprep.subr.bf16.mxu0 0
        %1458 = vmatpush1.bf16.msra.mxu0 0
        %1459 = vmatprep.subr.bf16.mxu0 0
        %1460 = vmatpush1.bf16.msra.mxu0 0
        %1461 = vmatprep.subr.bf16.mxu0 0
        %1462 = vmatpush1.bf16.msra.mxu0 0
        %1463 = vmatprep.subr.bf16.mxu0 0
        %1464 = vmatpush1.bf16.msra.mxu0 0
        %1465 = vmatprep.subr.bf16.mxu0 0
        %1466 = vmatpush1.bf16.msra.mxu0 0
        %1467 = vmatprep.subr.bf16.mxu0 0
        %1468 = vmatpush1.bf16.msra.mxu0 0
        %1469 = vmatprep.subr.bf16.mxu0 0
        %1470 = vmatpush1.bf16.msra.mxu0 0
        %1471 = vmatprep.subr.bf16.mxu0 0
        %1472 = vmatpush1.bf16.msra.mxu0 0
        %1473 = vmatprep.subr.bf16.mxu0 0
        %1474 = vmatpush1.bf16.msra.mxu0 0
        %1475 = vmatprep.subr.bf16.mxu0 0
        %1476 = vmatpush1.bf16.msra.mxu0 0
        %1477 = vmatprep.subr.bf16.mxu0 0
        %1478 = vmatpush1.bf16.msra.mxu0 0
        %1479 = vmatprep.mubr.bf16.mxu0 0
        %1480 = vmatmul.mubr.bf16.gmra.mrb[0].mxu0 %v1442
        %v1481 = vpop.f32.mrb[0].mxu0
        %v1482 = vadd.f32 0.0, %v1481
        %v1483 = vpop.f32.mrb[0].mxu0
        %v1484 = vpop.f32.mrb[0].mxu0
        %v1485 = vpop.f32.mrb[0].mxu0
        %1486 = vdwg.mxu0
        %v1488 = vunpack.c.l.b16 %v1360
        %1489 = vset.pattern.permute.xlu0 0
        %1490 = vperm.xlu0 %1489, %v1488
        %v1491 = vpop.permute.xlu0 %1490
        %v1492 = vlaneseq
        %v1493 = vshrl.u32 %v1492, 7
        %v1494 = vsub.s32 %v1065, %v1493
        %v1495 = vrot.slane %v1491, %v1494
        %v1496 = vpack.c.b16 %v1495, %v1495
        %v1498 = vsel %vm1113, %v1496, 0
        %v1501 = vsel %vm1387, %v1368, 0
        %1503 = vmatprep.subr.bf16.mxu0 0
        %1504 = vmatpush1.bf16.msra.mxu0 %v1501
        %1505 = vmatprep.subr.bf16.mxu0 0
        %1506 = vmatpush1.bf16.msra.mxu0 0
        %1507 = vmatprep.subr.bf16.mxu0 0
        %1508 = vmatpush1.bf16.msra.mxu0 0
        %1509 = vmatprep.subr.bf16.mxu0 0
        %1510 = vmatpush1.bf16.msra.mxu0 0
        %1511 = vmatprep.subr.bf16.mxu0 0
        %1512 = vmatpush1.bf16.msra.mxu0 0
        %1513 = vmatprep.subr.bf16.mxu0 0
        %1514 = vmatpush1.bf16.msra.mxu0 0
        %1515 = vmatprep.subr.bf16.mxu0 0
        %1516 = vmatpush1.bf16.msra.mxu0 0
        %1517 = vmatprep.subr.bf16.mxu0 0
        %1518 = vmatpush1.bf16.msra.mxu0 0
        %1519 = vmatprep.subr.bf16.mxu0 0
        %1520 = vmatpush1.bf16.msra.mxu0 0
        %1521 = vmatprep.subr.bf16.mxu0 0
        %1522 = vmatpush1.bf16.msra.mxu0 0
        %1523 = vmatprep.subr.bf16.mxu0 0
        %1524 = vmatpush1.bf16.msra.mxu0 0
        %1525 = vmatprep.subr.bf16.mxu0 0
        %1526 = vmatpush1.bf16.msra.mxu0 0
        %1527 = vmatprep.subr.bf16.mxu0 0
        %1528 = vmatpush1.bf16.msra.mxu0 0
        %1529 = vmatprep.subr.bf16.mxu0 0
        %1530 = vmatpush1.bf16.msra.mxu0 0
        %1531 = vmatprep.subr.bf16.mxu0 0
        %1532 = vmatpush1.bf16.msra.mxu0 0
        %1533 = vmatprep.subr.bf16.mxu0 0
        %1534 = vmatpush1.bf16.msra.mxu0 0
        %1535 = vmatprep.mubr.bf16.mxu0 0
        %1536 = vmatmul.mubr.bf16.gmra.mrb[0].mxu0 %v1498
        %v1537 = vpop.f32.mrb[0].mxu0
        %v1538 = vadd.f32 0.0, %v1537
        %v1539 = vpop.f32.mrb[0].mxu0
        %v1540 = vpop.f32.mrb[0].mxu0
        %v1541 = vpop.f32.mrb[0].mxu0
        %1542 = vdwg.mxu0
        %v1544 = vunpack.c.l.b16 %v1361
        %1545 = vset.pattern.permute.xlu0 0
        %1546 = vperm.xlu0 %1545, %v1544
        %v1547 = vpop.permute.xlu0 %1546
        %v1548 = vlaneseq
        %v1549 = vshrl.u32 %v1548, 7
        %v1550 = vsub.s32 %v1065, %v1549
        %v1551 = vrot.slane %v1547, %v1550
        %v1552 = vpack.c.b16 %v1551, %v1551
        %v1554 = vsel %vm1113, %v1552, 0
        %v1557 = vsel %vm1387, %v1369, 0
        %1559 = vmatprep.subr.bf16.mxu0 0
        %1560 = vmatpush1.bf16.msra.mxu0 %v1557
        %1561 = vmatprep.subr.bf16.mxu0 0
        %1562 = vmatpush1.bf16.msra.mxu0 0
        %1563 = vmatprep.subr.bf16.mxu0 0
        %1564 = vmatpush1.bf16.msra.mxu0 0
        %1565 = vmatprep.subr.bf16.mxu0 0
        %1566 = vmatpush1.bf16.msra.mxu0 0
        %1567 = vmatprep.subr.bf16.mxu0 0
        %1568 = vmatpush1.bf16.msra.mxu0 0
        %1569 = vmatprep.subr.bf16.mxu0 0
        %1570 = vmatpush1.bf16.msra.mxu0 0
        %1571 = vmatprep.subr.bf16.mxu0 0
        %1572 = vmatpush1.bf16.msra.mxu0 0
        %1573 = vmatprep.subr.bf16.mxu0 0
        %1574 = vmatpush1.bf16.msra.mxu0 0
        %1575 = vmatprep.subr.bf16.mxu0 0
        %1576 = vmatpush1.bf16.msra.mxu0 0
        %1577 = vmatprep.subr.bf16.mxu0 0
        %1578 = vmatpush1.bf16.msra.mxu0 0
        %1579 = vmatprep.subr.bf16.mxu0 0
        %1580 = vmatpush1.bf16.msra.mxu0 0
        %1581 = vmatprep.subr.bf16.mxu0 0
        %1582 = vmatpush1.bf16.msra.mxu0 0
        %1583 = vmatprep.subr.bf16.mxu0 0
        %1584 = vmatpush1.bf16.msra.mxu0 0
        %1585 = vmatprep.subr.bf16.mxu0 0
        %1586 = vmatpush1.bf16.msra.mxu0 0
        %1587 = vmatprep.subr.bf16.mxu0 0
        %1588 = vmatpush1.bf16.msra.mxu0 0
        %1589 = vmatprep.subr.bf16.mxu0 0
        %1590 = vmatpush1.bf16.msra.mxu0 0
        %1591 = vmatprep.mubr.bf16.mxu0 0
        %1592 = vmatmul.mubr.bf16.gmra.mrb[0].mxu0 %v1554
        %v1593 = vpop.f32.mrb[0].mxu0
        %v1594 = vadd.f32 0.0, %v1593
        %v1595 = vpop.f32.mrb[0].mxu0
        %v1596 = vpop.f32.mrb[0].mxu0
        %v1597 = vpop.f32.mrb[0].mxu0
        %1598 = vdwg.mxu0
        %v1600 = vunpack.c.l.b16 %v1362
        %1601 = vset.pattern.permute.xlu0 0
        %1602 = vperm.xlu0 %1601, %v1600
        %v1603 = vpop.permute.xlu0 %1602
        %v1604 = vlaneseq
        %v1605 = vshrl.u32 %v1604, 7
        %v1606 = vsub.s32 %v1065, %v1605
        %v1607 = vrot.slane %v1603, %v1606
        %v1608 = vpack.c.b16 %v1607, %v1607
        %v1610 = vsel %vm1113, %v1608, 0
        %v1613 = vsel %vm1387, %v1370, 0
        %1615 = vmatprep.subr.bf16.mxu0 0
        %1616 = vmatpush1.bf16.msra.mxu0 %v1613
        %1617 = vmatprep.subr.bf16.mxu0 0
        %1618 = vmatpush1.bf16.msra.mxu0 0
        %1619 = vmatprep.subr.bf16.mxu0 0
        %1620 = vmatpush1.bf16.msra.mxu0 0
        %1621 = vmatprep.subr.bf16.mxu0 0
        %1622 = vmatpush1.bf16.msra.mxu0 0
        %1623 = vmatprep.subr.bf16.mxu0 0
        %1624 = vmatpush1.bf16.msra.mxu0 0
        %1625 = vmatprep.subr.bf16.mxu0 0
        %1626 = vmatpush1.bf16.msra.mxu0 0
        %1627 = vmatprep.subr.bf16.mxu0 0
        %1628 = vmatpush1.bf16.msra.mxu0 0
        %1629 = vmatprep.subr.bf16.mxu0 0
        %1630 = vmatpush1.bf16.msra.mxu0 0
        %1631 = vmatprep.subr.bf16.mxu0 0
        %1632 = vmatpush1.bf16.msra.mxu0 0
        %1633 = vmatprep.subr.bf16.mxu0 0
        %1634 = vmatpush1.bf16.msra.mxu0 0
        %1635 = vmatprep.subr.bf16.mxu0 0
        %1636 = vmatpush1.bf16.msra.mxu0 0
        %1637 = vmatprep.subr.bf16.mxu0 0
        %1638 = vmatpush1.bf16.msra.mxu0 0
        %1639 = vmatprep.subr.bf16.mxu0 0
        %1640 = vmatpush1.bf16.msra.mxu0 0
        %1641 = vmatprep.subr.bf16.mxu0 0
        %1642 = vmatpush1.bf16.msra.mxu0 0
        %1643 = vmatprep.subr.bf16.mxu0 0
        %1644 = vmatpush1.bf16.msra.mxu0 0
        %1645 = vmatprep.subr.bf16.mxu0 0
        %1646 = vmatpush1.bf16.msra.mxu0 0
        %1647 = vmatprep.mubr.bf16.mxu0 0
        %1648 = vmatmul.mubr.bf16.gmra.mrb[0].mxu0 %v1610
        %v1649 = vpop.f32.mrb[0].mxu0
        %v1650 = vadd.f32 0.0, %v1649
        %v1651 = vpop.f32.mrb[0].mxu0
        %v1652 = vpop.f32.mrb[0].mxu0
        %v1653 = vpop.f32.mrb[0].mxu0
        %1654 = vdwg.mxu0
        %v1656 = vunpack.c.l.b16 %v1363
        %1657 = vset.pattern.permute.xlu0 0
        %1658 = vperm.xlu0 %1657, %v1656
        %v1659 = vpop.permute.xlu0 %1658
        %v1660 = vlaneseq
        %v1661 = vshrl.u32 %v1660, 7
        %v1662 = vsub.s32 %v1065, %v1661
        %v1663 = vrot.slane %v1659, %v1662
        %v1664 = vpack.c.b16 %v1663, %v1663
        %v1666 = vsel %vm1113, %v1664, 0
        %v1669 = vsel %vm1387, %v1371, 0
        %1671 = vmatprep.subr.bf16.mxu0 0
        %1672 = vmatpush1.bf16.msra.mxu0 %v1669
        %1673 = vmatprep.subr.bf16.mxu0 0
        %1674 = vmatpush1.bf16.msra.mxu0 0
        %1675 = vmatprep.subr.bf16.mxu0 0
        %1676 = vmatpush1.bf16.msra.mxu0 0
        %1677 = vmatprep.subr.bf16.mxu0 0
        %1678 = vmatpush1.bf16.msra.mxu0 0
        %1679 = vmatprep.subr.bf16.mxu0 0
        %1680 = vmatpush1.bf16.msra.mxu0 0
        %1681 = vmatprep.subr.bf16.mxu0 0
        %1682 = vmatpush1.bf16.msra.mxu0 0
        %1683 = vmatprep.subr.bf16.mxu0 0
        %1684 = vmatpush1.bf16.msra.mxu0 0
        %1685 = vmatprep.subr.bf16.mxu0 0
        %1686 = vmatpush1.bf16.msra.mxu0 0
        %1687 = vmatprep.subr.bf16.mxu0 0
        %1688 = vmatpush1.bf16.msra.mxu0 0
        %1689 = vmatprep.subr.bf16.mxu0 0
        %1690 = vmatpush1.bf16.msra.mxu0 0
        %1691 = vmatprep.subr.bf16.mxu0 0
        %1692 = vmatpush1.bf16.msra.mxu0 0
        %1693 = vmatprep.subr.bf16.mxu0 0
        %1694 = vmatpush1.bf16.msra.mxu0 0
        %1695 = vmatprep.subr.bf16.mxu0 0
        %1696 = vmatpush1.bf16.msra.mxu0 0
        %1697 = vmatprep.subr.bf16.mxu0 0
        %1698 = vmatpush1.bf16.msra.mxu0 0
        %1699 = vmatprep.subr.bf16.mxu0 0
        %1700 = vmatpush1.bf16.msra.mxu0 0
        %1701 = vmatprep.subr.bf16.mxu0 0
        %1702 = vmatpush1.bf16.msra.mxu0 0
        %1703 = vmatprep.mubr.bf16.mxu0 0
        %1704 = vmatmul.mubr.bf16.gmra.mrb[0].mxu0 %v1666
        %v1705 = vpop.f32.mrb[0].mxu0
        %v1706 = vadd.f32 0.0, %v1705
        %v1707 = vpop.f32.mrb[0].mxu0
        %v1708 = vpop.f32.mrb[0].mxu0
        %v1709 = vpop.f32.mrb[0].mxu0
        %1710 = vdwg.mxu0
        %v1712 = vunpack.c.l.b16 %v1364
        %1713 = vset.pattern.permute.xlu0 0
        %1714 = vperm.xlu0 %1713, %v1712
        %v1715 = vpop.permute.xlu0 %1714
        %v1716 = vlaneseq
        %v1717 = vshrl.u32 %v1716, 7
        %v1718 = vsub.s32 %v1065, %v1717
        %v1719 = vrot.slane %v1715, %v1718
        %v1720 = vpack.c.b16 %v1719, %v1719
        %v1722 = vsel %vm1113, %v1720, 0
        %v1725 = vsel %vm1387, %v1372, 0
        %1727 = vmatprep.subr.bf16.mxu0 0
        %1728 = vmatpush1.bf16.msra.mxu0 %v1725
        %1729 = vmatprep.subr.bf16.mxu0 0
        %1730 = vmatpush1.bf16.msra.mxu0 0
        %1731 = vmatprep.subr.bf16.mxu0 0
        %1732 = vmatpush1.bf16.msra.mxu0 0
        %1733 = vmatprep.subr.bf16.mxu0 0
        %1734 = vmatpush1.bf16.msra.mxu0 0
        %1735 = vmatprep.subr.bf16.mxu0 0
        %1736 = vmatpush1.bf16.msra.mxu0 0
        %1737 = vmatprep.subr.bf16.mxu0 0
        %1738 = vmatpush1.bf16.msra.mxu0 0
        %1739 = vmatprep.subr.bf16.mxu0 0
        %1740 = vmatpush1.bf16.msra.mxu0 0
        %1741 = vmatprep.subr.bf16.mxu0 0
        %1742 = vmatpush1.bf16.msra.mxu0 0
        %1743 = vmatprep.subr.bf16.mxu0 0
        %1744 = vmatpush1.bf16.msra.mxu0 0
        %1745 = vmatprep.subr.bf16.mxu0 0
        %1746 = vmatpush1.bf16.msra.mxu0 0
        %1747 = vmatprep.subr.bf16.mxu0 0
        %1748 = vmatpush1.bf16.msra.mxu0 0
        %1749 = vmatprep.subr.bf16.mxu0 0
        %1750 = vmatpush1.bf16.msra.mxu0 0
        %1751 = vmatprep.subr.bf16.mxu0 0
        %1752 = vmatpush1.bf16.msra.mxu0 0
        %1753 = vmatprep.subr.bf16.mxu0 0
        %1754 = vmatpush1.bf16.msra.mxu0 0
        %1755 = vmatprep.subr.bf16.mxu0 0
        %1756 = vmatpush1.bf16.msra.mxu0 0
        %1757 = vmatprep.subr.bf16.mxu0 0
        %1758 = vmatpush1.bf16.msra.mxu0 0
        %1759 = vmatprep.mubr.bf16.mxu0 0
        %1760 = vmatmul.mubr.bf16.gmra.mrb[0].mxu0 %v1722
        %v1761 = vpop.f32.mrb[0].mxu0
        %v1762 = vadd.f32 0.0, %v1761
        %v1763 = vpop.f32.mrb[0].mxu0
        %v1764 = vpop.f32.mrb[0].mxu0
        %v1765 = vpop.f32.mrb[0].mxu0
        %1766 = vdwg.mxu0
        %v1768 = vunpack.c.l.b16 %v1365
        %1769 = vset.pattern.permute.xlu0 0
        %1770 = vperm.xlu0 %1769, %v1768
        %v1771 = vpop.permute.xlu0 %1770
        %v1772 = vlaneseq
        %v1773 = vshrl.u32 %v1772, 7
        %v1774 = vsub.s32 %v1065, %v1773
        %v1775 = vrot.slane %v1771, %v1774
        %v1776 = vpack.c.b16 %v1775, %v1775
        %v1778 = vsel %vm1113, %v1776, 0
        %v1781 = vsel %vm1387, %v1373, 0
        %1783 = vmatprep.subr.bf16.mxu0 0
        %1784 = vmatpush1.bf16.msra.mxu0 %v1781
        %1785 = vmatprep.subr.bf16.mxu0 0
        %1786 = vmatpush1.bf16.msra.mxu0 0
        %1787 = vmatprep.subr.bf16.mxu0 0
        %1788 = vmatpush1.bf16.msra.mxu0 0
        %1789 = vmatprep.subr.bf16.mxu0 0
        %1790 = vmatpush1.bf16.msra.mxu0 0
        %1791 = vmatprep.subr.bf16.mxu0 0
        %1792 = vmatpush1.bf16.msra.mxu0 0
        %1793 = vmatprep.subr.bf16.mxu0 0
        %1794 = vmatpush1.bf16.msra.mxu0 0
        %1795 = vmatprep.subr.bf16.mxu0 0
        %1796 = vmatpush1.bf16.msra.mxu0 0
        %1797 = vmatprep.subr.bf16.mxu0 0
        %1798 = vmatpush1.bf16.msra.mxu0 0
        %1799 = vmatprep.subr.bf16.mxu0 0
        %1800 = vmatpush1.bf16.msra.mxu0 0
        %1801 = vmatprep.subr.bf16.mxu0 0
        %1802 = vmatpush1.bf16.msra.mxu0 0
        %1803 = vmatprep.subr.bf16.mxu0 0
        %1804 = vmatpush1.bf16.msra.mxu0 0
        %1805 = vmatprep.subr.bf16.mxu0 0
        %1806 = vmatpush1.bf16.msra.mxu0 0
        %1807 = vmatprep.subr.bf16.mxu0 0
        %1808 = vmatpush1.bf16.msra.mxu0 0
        %1809 = vmatprep.subr.bf16.mxu0 0
        %1810 = vmatpush1.bf16.msra.mxu0 0
        %1811 = vmatprep.subr.bf16.mxu0 0
        %1812 = vmatpush1.bf16.msra.mxu0 0
        %1813 = vmatprep.subr.bf16.mxu0 0
        %1814 = vmatpush1.bf16.msra.mxu0 0
        %1815 = vmatprep.mubr.bf16.mxu0 0
        %1816 = vmatmul.mubr.bf16.gmra.mrb[0].mxu0 %v1778
        %v1817 = vpop.f32.mrb[0].mxu0
        %v1818 = vadd.f32 0.0, %v1817
        %v1819 = vpop.f32.mrb[0].mxu0
        %v1820 = vpop.f32.mrb[0].mxu0
        %v1821 = vpop.f32.mrb[0].mxu0
        %1822 = vdwg.mxu0
        %v1823 = vld [vmem:[%s603] sm:$0xff]
        %v1832 = vrot.slane %v1482, 7
        %v1833 = vsel %vm1098, %v1832, %v1426
        %v1834 = vrot.slane %v1538, 6
        %v1835 = vsel %vm1100, %v1834, %v1833
        %v1836 = vrot.slane %v1594, 5
        %v1837 = vsel %vm1102, %v1836, %v1835
        %v1838 = vrot.slane %v1650, 4
        %v1839 = vsel %vm1104, %v1838, %v1837
        %v1840 = vrot.slane %v1706, 3
        %v1841 = vsel %vm1106, %v1840, %v1839
        %v1842 = vrot.slane %v1762, 2
        %v1843 = vsel %vm1108, %v1842, %v1841
        %v1844 = vrot.slane %v1818, 1
        %v1845 = vsel %vm1110, %v1844, %v1843
        %1847 = vrot.lane.b32.xlu0 %v730, 64
        %v1848 = vpop.permute.xlu0 %1847
        %1851 = vrot.lane.b32.xlu0 %v1823, 64
        %v1852 = vpop.permute.xlu0 %1851
        %v1854 = vsel %vm735, %v1845, %v1848
        %v1855 = vsel %vm659, %v1854, %v1852
        %v1856 = vpack.c.bf16 %v1855, %v1855
        %v1857 = vld [vmem:[%s10] sm:$0xf]
        %v1858 = vld [vmem:[%s10 + $0x4] sm:$0xf]
        %v1859 = vld [vmem:[%s10 + $0x8] sm:$0xf]
        %v1860 = vld [vmem:[%s10 + $0xc] sm:$0xf]
        %v1861 = vld [vmem:[%s10 + $0x10] sm:$0xf]
        %v1862 = vld [vmem:[%s10 + $0x14] sm:$0xf]
        %v1863 = vld [vmem:[%s10 + $0x18] sm:$0xf]
        %v1864 = vld [vmem:[%s10 + $0x1c] sm:$0xf]
        %v1865 = vld [vmem:[%s10 + $0x20] sm:$0xf]
        %v1866 = vld [vmem:[%s10 + $0x24] sm:$0xf]
        %v1867 = vld [vmem:[%s10 + $0x28] sm:$0xf]
        %v1868 = vld [vmem:[%s10 + $0x2c] sm:$0xf]
        %v1869 = vld [vmem:[%s11] sm:$0x1]
        %v1871 = vlaneseq
        %v1872 = vshrl.u32 %v1871, 7
        %v1873 = vsub.s32 0, %v1872
        %v1874 = vrot.slane %v1869, %v1873
        %v1888 = vunpack.c.l.b16 %v1857
        %v1889 = vunpack.c.l.b16 %v1858
        %v1890 = vunpack.c.l.b16 %v1859
        %v1891 = vunpack.c.l.b16 %v1860
        %v1892 = vunpack.c.l.b16 %v1861
        %v1893 = vunpack.c.l.b16 %v1862
        %v1894 = vunpack.c.l.b16 %v1863
        %v1895 = vunpack.c.l.b16 %v1864
        %v1896 = vunpack.c.l.b16 %v1865
        %v1897 = vunpack.c.l.b16 %v1866
        %v1898 = vunpack.c.l.b16 %v1867
        %v1899 = vunpack.c.l.b16 %v1868
        %v1900 = vpack.c.b16 %v1889, %v1888
        %v1901 = vpack.c.b16 %v1891, %v1890
        %v1902 = vpack.c.b16 %v1893, %v1892
        %v1903 = vpack.c.b16 %v1895, %v1894
        %v1904 = vpack.c.b16 %v1897, %v1896
        %v1905 = vpack.c.b16 %v1899, %v1898
        %vm1912 = vcmask 785408
        %v1914 = vsel %vm1912, %v1856, 0
        %1916 = vmatprep.subr.bf16.mxu0 0
        %1917 = vmatpush1.bf16.msra.mxu0 %v1900
        %1918 = vmatprep.subr.bf16.mxu0 0
        %1919 = vmatpush1.bf16.msra.mxu0 %v1901
        %1920 = vmatprep.subr.bf16.mxu0 0
        %1921 = vmatpush1.bf16.msra.mxu0 %v1902
        %1922 = vmatprep.subr.bf16.mxu0 0
        %1923 = vmatpush1.bf16.msra.mxu0 %v1903
        %1924 = vmatprep.subr.bf16.mxu0 0
        %1925 = vmatpush1.bf16.msra.mxu0 %v1904
        %1926 = vmatprep.subr.bf16.mxu0 0
        %1927 = vmatpush1.bf16.msra.mxu0 %v1905
        %1928 = vmatprep.subr.bf16.mxu0 0
        %1929 = vmatpush1.bf16.msra.mxu0 0
        %1930 = vmatprep.subr.bf16.mxu0 0
        %1931 = vmatpush1.bf16.msra.mxu0 0
        %1932 = vmatprep.subr.bf16.mxu0 0
        %1933 = vmatpush1.bf16.msra.mxu0 0
        %1934 = vmatprep.subr.bf16.mxu0 0
        %1935 = vmatpush1.bf16.msra.mxu0 0
        %1936 = vmatprep.subr.bf16.mxu0 0
        %1937 = vmatpush1.bf16.msra.mxu0 0
        %1938 = vmatprep.subr.bf16.mxu0 0
        %1939 = vmatpush1.bf16.msra.mxu0 0
        %1940 = vmatprep.subr.bf16.mxu0 0
        %1941 = vmatpush1.bf16.msra.mxu0 0
        %1942 = vmatprep.subr.bf16.mxu0 0
        %1943 = vmatpush1.bf16.msra.mxu0 0
        %1944 = vmatprep.subr.bf16.mxu0 0
        %1945 = vmatpush1.bf16.msra.mxu0 0
        %1946 = vmatprep.subr.bf16.mxu0 0
        %1947 = vmatpush1.bf16.msra.mxu0 0
        %1948 = vmatprep.mubr.bf16.mxu0 0
        %1949 = vmatmul.mubr.bf16.gmra.mrb[0].mxu0 %v1914
        %v1950 = vpop.f32.mrb[0].mxu0
        %v1951 = vadd.f32 %v1874, %v1950
        %v1952 = vpop.f32.mrb[0].mxu0
        %v1953 = vpop.f32.mrb[0].mxu0
        %v1954 = vpop.f32.mrb[0].mxu0
        %1955 = vdwg.mxu0
        %vm1956 = vcmask 130048
        %v1957 = vsel %vm1956, %v1951, -inf
        %1958 = vmax.xlane.f32.xlu0 %v1957
        %v1959 = vpop.xlane.xlu0 %1958
        %v1960 = vsub.f32 %v1951, %v1959
        %v1961 = vmul.f32 %v1960, 1.442695
        %v1962 = vpow.pop %v1961
        %v1963 = vsel %vm1956, %v1962, 0.0
        %1964 = vadd.xlane.f32.xlu0 %v1963
        %v1965 = vpop.xlane.xlu0 %1964
        %v1966 = vlog2.pop %v1965
        %v1967 = vmul.f32 %v1966, 0.6931472
        %v1968 = vsub.f32 %v1960, %v1967
        %v1969 = vmin.f32 %v1951, 0.0
        %v1970 = vand.u32 2147483647, %v1951
        %v1971 = vsub.f32 0.0, %v1970
        %v1972 = vmul.f32 %v1971, 1.442695
        %v1973 = vpow.pop %v1972
        %v1974 = vadd.f32 %v1973, 1.0
        %v1975 = vlog2.pop %v1974
        %v1976 = vmul.f32 %v1975, 0.6931472
        %v1977 = vsub.f32 %v1969, %v1976
        %1979 = vset.pattern.permute.xlu0 16
        %1980 = vperm.xlu0 %1979, %v1977
        %v1981 = vpop.permute.xlu0 %1980
        %v1983 = vadd.f32 %v1981, %v1968
        %1984 = vst.msk [vmem:[%s607] sm:$0xff] %vm1956, %v1983
        %v1985 = vsub.f32 0.0, %v1951
        %v1986 = vmin.f32 %v1985, 0.0
        %v1987 = vand.u32 2147483647, %v1985
        %v1988 = vsub.f32 0.0, %v1987
        %v1989 = vmul.f32 %v1988, 1.442695
        %v1990 = vpow.pop %v1989
        %v1991 = vadd.f32 %v1990, 1.0
        %v1992 = vlog2.pop %v1991
        %v1993 = vmul.f32 %v1992, 0.6931472
        %v1994 = vsub.f32 %v1986, %v1993
        %1996 = vset.pattern.permute.xlu0 16
        %1997 = vperm.xlu0 %1996, %v1994
        %v1998 = vpop.permute.xlu0 %1997
        %2008 = vset.pattern.permute.xlu0 0
        %2009 = vperm.xlu0 %2008, %v1350
        %v2010 = vpop.permute.xlu0 %2009
        %2011 = vset.pattern.permute.xlu0 0
        %2012 = vperm.xlu0 %2011, %v1351
        %v2013 = vpop.permute.xlu0 %2012
        %2014 = vset.pattern.permute.xlu0 0
        %2015 = vperm.xlu0 %2014, %v1352
        %v2016 = vpop.permute.xlu0 %2015
        %2017 = vset.pattern.permute.xlu0 0
        %2018 = vperm.xlu0 %2017, %v1353
        %v2019 = vpop.permute.xlu0 %2018
        %2020 = vset.pattern.permute.xlu0 0
        %2021 = vperm.xlu0 %2020, %v1354
        %v2022 = vpop.permute.xlu0 %2021
        %2023 = vset.pattern.permute.xlu0 0
        %2024 = vperm.xlu0 %2023, %v1355
        %v2025 = vpop.permute.xlu0 %2024
        %2026 = vset.pattern.permute.xlu0 0
        %2027 = vperm.xlu0 %2026, %v1356
        %v2028 = vpop.permute.xlu0 %2027
        %2029 = vset.pattern.permute.xlu0 0
        %2030 = vperm.xlu0 %2029, %v1357
        %v2031 = vpop.permute.xlu0 %2030
        %v2032 = vlaneseq
        %v2033 = vshrl.u32 %v2032, 7
        %v2034 = vsub.s32 %v1065, %v2033
        %v2035 = vrot.slane %v2010, %v2034
        %v2036 = vlaneseq
        %v2037 = vshrl.u32 %v2036, 7
        %v2038 = vsub.s32 %v1065, %v2037
        %v2039 = vrot.slane %v2013, %v2038
        %v2040 = vlaneseq
        %v2041 = vshrl.u32 %v2040, 7
        %v2042 = vsub.s32 %v1065, %v2041
        %v2043 = vrot.slane %v2016, %v2042
        %v2044 = vlaneseq
        %v2045 = vshrl.u32 %v2044, 7
        %v2046 = vsub.s32 %v1065, %v2045
        %v2047 = vrot.slane %v2019, %v2046
        %v2048 = vlaneseq
        %v2049 = vshrl.u32 %v2048, 7
        %v2050 = vsub.s32 %v1065, %v2049
        %v2051 = vrot.slane %v2022, %v2050
        %v2052 = vlaneseq
        %v2053 = vshrl.u32 %v2052, 7
        %v2054 = vsub.s32 %v1065, %v2053
        %v2055 = vrot.slane %v2025, %v2054
        %v2056 = vlaneseq
        %v2057 = vshrl.u32 %v2056, 7
        %v2058 = vsub.s32 %v1065, %v2057
        %v2059 = vrot.slane %v2028, %v2058
        %v2060 = vlaneseq
        %v2061 = vshrl.u32 %v2060, 7
        %v2062 = vsub.s32 %v1065, %v2061
        %v2063 = vrot.slane %v2031, %v2062
        %v2064 = vsel %vm1098, %v2039, %v2035
        %v2065 = vsel %vm1100, %v2043, %v2064
        %v2066 = vsel %vm1102, %v2047, %v2065
        %v2067 = vsel %vm1104, %v2051, %v2066
        %v2068 = vsel %vm1106, %v2055, %v2067
        %v2069 = vsel %vm1108, %v2059, %v2068
        %v2070 = vsel %vm1110, %v2063, %v2069
        %v2072 = vadd.f32 %v1998, %v2070
        %2073 = vst.msk [vmem:[%s611] sm:$0xff] %vm1113, %v2072
        %p2074 = scmp.lt.s32.totalorder %s30, 1
        %s2075 = scalar_select %p2074, %s30, 1
        %s2076 = smul.addr %s2075, 8
        %s2077 = scalar_lea.vmem %s12, %s2076
        %p2078 = scmp.lt.s32.totalorder %s30, 1
        %s2079 = scalar_select %p2078, %s30, 1
        %s2080 = smul.addr %s2079, 8
        %s2081 = scalar_lea.vmem %s13, %s2080
        %s2082 = sand.u32 %s372, 1
        %s2083 = scalar_lea.sflag [#allocation3], %s2082
        %s2084 = sand.u32 %s372, 1
        %s2085 = smul.addr %s2084, 8
        %s2086 = scalar_lea.vmem [#allocation2], %s2085
        %p2087 = scmp.lt.s32.totalorder %s30, 1
        %s2088 = scalar_select %p2087, %s30, 1
        %s2089 = smul.addr %s2088, 8
        %s2090 = scalar_lea.vmem %s15, %s2089
        // Predicated region
        $region69: #{decoder_attention_forward.1} parent=67 // pred_check
          %p2091 = pneg %p330
        $region70: #{decoder_attention_forward.1} parent=67 // pred_check_branch
          %2093 = sbr.rel (%p2091) target = $region72
        $region71: #{decoder_attention_forward.1} parent=67 // pred_region
          _
        $region72: #{decoder_attention_forward.1} parent=67 // pred_fallthru
          _
        // Predicated region
        $region73: #{decoder_attention_forward.1} parent=67 // pred_check
          %p2094 = pneg %p356
        $region74: #{decoder_attention_forward.1} parent=67 // pred_check_branch
          %2096 = sbr.rel (%p2094) target = $region76
        $region75: #{decoder_attention_forward.1} parent=67 // pred_region
          _
        $region76: #{decoder_attention_forward.1} parent=67 // pred_fallthru
          _
        // Predicated region
        $region77: #{decoder_attention_forward.1} parent=67 // pred_check
          %p2097 = pneg %p382
        $region78: #{decoder_attention_forward.1} parent=67 // pred_check_branch
          %2099 = sbr.rel (%p2097) target = $region80
        $region79: #{decoder_attention_forward.1} parent=67 // pred_region
          %s2101 = ssub.s32 128, 128
          %2102 = vsyncadd %s2083, %s2101
          %s2103 = smul.addr %s30, 128
          %s2104 = scalar_lea.hbm %s14, %s2103
          %s2106 = sshll.u32 %s2086, 4
          %s2107 = int_to_ptr.vmem [resolvable:$true] %s2106
          %2109 = dma.vmem_to_hbm [thread:$0]  %s2107, 128, %s2104, %s2083
        $region80: #{decoder_attention_forward.1} parent=67 // pred_fallthru
          _
        // Predicated region
        $region81: #{decoder_attention_forward.1} parent=67 // pred_check
          %p2110 = pneg %p408
        $region82: #{decoder_attention_forward.1} parent=67 // pred_check_branch
          %2112 = sbr.rel (%p2110) target = $region84
        $region83: #{decoder_attention_forward.1} parent=67 // pred_region
          _
        $region84: #{decoder_attention_forward.1} parent=67 // pred_fallthru
          _
      $region68: #{decoder_attention_forward.1} parent=5 // pred_fallthru
        _
      %p2113 = scmp.le.s32.totalorder 2, %s25
      // Predicated region
      $region85: #{decoder_attention_forward.1} parent=5 // pred_check
        %p2114 = pneg %p2113
      $region86: #{decoder_attention_forward.1} parent=5 // pred_check_branch
        %2116 = sbr.rel (%p2114) target = $region88
      $region87: #{decoder_attention_forward.1} parent=5 // pred_region
        %s2117 = ssub.s32 %s25, 2
        // Predicated region
        $region89: #{decoder_attention_forward.1} parent=87 // pred_check
          %p2118 = pneg %p336
        $region90: #{decoder_attention_forward.1} parent=87 // pred_check_branch
          %2120 = sbr.rel (%p2118) target = $region92
        $region91: #{decoder_attention_forward.1} parent=87 // pred_region
          %p2121 = scmp.lt.s32.totalorder %s31, 1
          %s2122 = scalar_select %p2121, %s31, 1
          %s2123 = smul.addr %s2122, 8
          %s2124 = scalar_lea.vmem %s12, %s2123
        $region92: #{decoder_attention_forward.1} parent=87 // pred_fallthru
          _
        // Predicated region
        $region93: #{decoder_attention_forward.1} parent=87 // pred_check
          %p2125 = pneg %p362
        $region94: #{decoder_attention_forward.1} parent=87 // pred_check_branch
          %2127 = sbr.rel (%p2125) target = $region96
        $region95: #{decoder_attention_forward.1} parent=87 // pred_region
          %p2128 = scmp.lt.s32.totalorder %s31, 1
          %s2129 = scalar_select %p2128, %s31, 1
          %s2130 = smul.addr %s2129, 8
          %s2131 = scalar_lea.vmem %s13, %s2130
        $region96: #{decoder_attention_forward.1} parent=87 // pred_fallthru
          _
        // Predicated region
        $region97: #{decoder_attention_forward.1} parent=87 // pred_check
          %p2132 = pneg %p388
        $region98: #{decoder_attention_forward.1} parent=87 // pred_check_branch
          %2134 = sbr.rel (%p2132) target = $region100
        $region99: #{decoder_attention_forward.1} parent=87 // pred_region
          %s2135 = sand.u32 %s373, 1
          %s2136 = scalar_lea.sflag [#allocation3], %s2135
          %s2137 = sand.u32 %s373, 1
          %s2138 = smul.addr %s2137, 8
          %s2139 = scalar_lea.vmem [#allocation2], %s2138
          %2140 = dma.done %s2136, 128
        $region100: #{decoder_attention_forward.1} parent=87 // pred_fallthru
          _
        // Predicated region
        $region101: #{decoder_attention_forward.1} parent=87 // pred_check
          %p2141 = pneg %p414
        $region102: #{decoder_attention_forward.1} parent=87 // pred_check_branch
          %2143 = sbr.rel (%p2141) target = $region104
        $region103: #{decoder_attention_forward.1} parent=87 // pred_region
          %p2144 = scmp.lt.s32.totalorder %s31, 1
          %s2145 = scalar_select %p2144, %s31, 1
          %s2146 = smul.addr %s2145, 8
          %s2147 = scalar_lea.vmem %s15, %s2146
        $region104: #{decoder_attention_forward.1} parent=87 // pred_fallthru
          _
      $region88: #{decoder_attention_forward.1} parent=5 // pred_fallthru
        _
    $region6: #{decoder_attention_forward.1} parent=1 // loop_footer
      %s29 = sadd.s32 1, %s25
    $region7: #{decoder_attention_forward.1} parent=1 // loop_footer_branch
      %24 = sbr.rel target = $region3
    $region8: #{decoder_attention_forward.1} parent=1 // loop_exit
      _
    %2148 = vsyncpa [#allocation3], 1
    %s2149 = scalar_lea.sflag [#allocation3], 1
    %2150 = vsyncpa %s2149, 1

</llo_original>
